<compile_context>
chip_gen: v7x
topology: tpu7x:2x2x1
jax: 0.10.0
libtpu: 0.0.40
codegen_flags: <defaults>
</compile_context>

<pallas_src>
import jax
import jax.numpy as jnp
import numpy as np
from jax.experimental import pallas as pl
from jax.experimental.pallas import tpu as pltpu

# ---------------- static config (mirrors gmvae.__init__ at small sizes) -----
BATCH       = 256                               # rows per call (amortizes overhead)
TILE_B      = 128                               # rows per grid step
CAT_SHAPES  = [(BATCH, 8), (BATCH, 8)]          # two one-hot categorical datasets
CAT_WIDTHS  = [s[1] for s in CAT_SHAPES]
NCAT        = sum(CAT_WIDTHS)                   # 16
NCON        = 16
INPUT_SIZE  = NCAT + NCON                       # 32
NHIDDENS    = [32, 32]
NLATENT     = 8
NPRIOR      = 8
K           = 3
LEAKY_SLOPE = 0.01                              # nn.LeakyReLU default
BN_EPS      = 1e-5                              # nn.BatchNorm1d default

H0, H1 = NHIDDENS
HEAD_W = 2 * NLATENT + 2 * NPRIOR + K           # 35 : mu_x|mu_w|logvar_x|logvar_w|qz
HEAD_QZ = 2 * NLATENT + 2 * NPRIOR              # 32
PX_W   = 2 * K * NLATENT                        # 48 : mu_px[k=0..2] | logvar_px[k=0..2]
BLKA_ROWS, BLKA_COLS = NLATENT + NPRIOR, 2 * H1     # (16, 64)  diag(wd0, wh1)
BLKB_ROWS, BLKB_COLS = 2 * H1, H0 + PX_W            # (64, 80)  diag(wd1, wpx)

# ----------------------- packed parameter slab layout ------------------------
# name: (row_off, col_off, rows, cols) -- every weight block starts at lane 0
# and on an 8-row boundary; the six bias rows share one 8-row block.
SLAB_OFF = {
    "we0":   (0,   0, INPUT_SIZE, H0),
    "we1":   (32,  0, H0,         H1),     # BN0 folded in
    "whead": (64,  0, H1,     HEAD_W),     # BN1 folded in; mu_x|mu_w|lv_x|lv_w|qz
    "wblka": (96,  0, BLKA_ROWS, BLKA_COLS),   # diag(wd0, wh1)
    "wblkb": (112, 0, BLKB_ROWS, BLKB_COLS),   # diag(wd1(BNd0 folded), wpx)
    "wout":  (176, 0, H0, INPUT_SIZE),     # BNd1 folded in
    "be0":   (208, 0, 1, H0),
    "be1":   (209, 0, 1, H1),
    "bhead": (210, 0, 1, HEAD_W),
    "bblka": (211, 0, 1, BLKA_COLS),
    "bblkb": (212, 0, 1, BLKB_COLS),
    "bout":  (213, 0, 1, INPUT_SIZE),
}
SLAB_ROWS  = 216
SLAB_LANES = 128

# ------------------------ packed output slab layout ---------------------------
OUT_MUX  = 0
OUT_MUW  = OUT_MUX + NLATENT                     # 8
OUT_LVX  = OUT_MUW + NPRIOR                      # 16
OUT_LVW  = OUT_LVX + NLATENT                     # 24
OUT_MUPX = OUT_LVW + NPRIOR                      # 32
OUT_LVPX = OUT_MUPX + K * NLATENT                # 56
OUT_CAT  = OUT_LVPX + K * NLATENT                # 80
OUT_CON  = OUT_CAT + NCAT                        # 96
OUT_QZ   = OUT_CON + NCON                        # 112
OUT_END  = OUT_QZ + K                            # 115
OUT_LANES = 128                                  # lane-dense output slab


# ---------------------------- shared helpers --------------------------------
def _leaky_relu(x):
    return jnp.where(x > 0, x, LEAKY_SLOPE * x)


def _bn_eval(x, bn):
    # bn is (4, N): [gamma, beta, running_mean, running_var] -- reference only
    gamma, beta, mean, var = bn[0:1], bn[1:2], bn[2:3], bn[3:4]
    return (x - mean) * jax.lax.rsqrt(var + BN_EPS) * gamma + beta


# ------------------------------- Pallas kernel -------------------------------
def gmvae_kernel(x_ref, p_ref, out_ref):
    def blk(name):
        r, c, nr, nc = SLAB_OFF[name]
        return p_ref[r:r + nr, c:c + nc]

    def linear(h, wname, bname):
        return jnp.dot(h, blk(wname), preferred_element_type=jnp.float32) + blk(bname)

    # ----- encoder: Linear -> LeakyReLU -> (Dropout=id) -> BN(folded fwd) ----
    x = x_ref[...]
    h = _leaky_relu(linear(x, "we0", "be0"))
    h = _leaky_relu(linear(h, "we1", "be1"))          # BN0 already folded into we1/be1

    # fused 5-head linear (BN1 folded in): mu_x | mu_w | logvar_x | logvar_w | qz
    head = linear(h, "whead", "bhead")                # (TB, 35)

    # qz softmax (last 3 lanes of head)
    qz_logits = head[:, HEAD_QZ:HEAD_W]
    m = jnp.max(qz_logits, axis=1, keepdims=True)
    e = jnp.exp(qz_logits - m)
    qz = e * pl.reciprocal(jnp.sum(e, axis=1, keepdims=True), approx=True)

    # ----- block-diagonal dot A: [mu_x | mu_w] @ diag(wd0, wh1) ----------------
    # eval-mode reparameterize => x_sample = mu_x, w_sample = mu_w.
    zcat = head[:, 0:NLATENT + NPRIOR]                # (TB, 16), lanes already aligned
    mix_pre = linear(zcat, "wblka", "bblka")          # (TB, 64): d_pre(32) | hp_pre(32)
    # per-lane activation select (no cross-lane movement): leaky on 0:32, tanh on 32:64
    lane = jax.lax.broadcasted_iota(jnp.int32, mix_pre.shape, 1)
    mix = jnp.where(lane < H1, _leaky_relu(mix_pre), jnp.tanh(mix_pre))

    # ----- block-diagonal dot B: mix @ diag(wd1, wpx) --------------------------
    db = linear(mix, "wblkb", "bblkb")                # (TB, 80): d2_pre(32) | px(48)
    d2 = _leaky_relu(db[:, 0:H0])                     # BNd0 folded into wd1
    px = db[:, H0:H0 + PX_W]                          # mu_px(24) | logvar_px(24)

    recon = linear(d2, "wout", "bout")                # (TB, 32), BNd1 folded in

    # ----- log-softmax over categorical segments ------------------------------
    cat_parts = []
    pos = 0
    for w in CAT_WIDTHS:                              # static loop, 2 segments
        seg = recon[:, pos:pos + w]
        ms = jnp.max(seg, axis=1, keepdims=True)
        lse = ms + jnp.log(jnp.sum(jnp.exp(seg - ms), axis=1, keepdims=True))
        cat_parts.append(seg - lse)
        pos += w
    con = recon[:, NCAT:NCAT + NCON]

    # ----- ONE unmasked full-width store ---------------------------------------
    pad = jnp.zeros((TILE_B, OUT_LANES - OUT_END), jnp.float32)
    out_ref[...] = jnp.concatenate(
        [head[:, 0:HEAD_QZ], px] + cat_parts + [con, qz, pad], axis=1)


# ------------------------------- wrapper -------------------------------------
@jax.jit
def gmvae_forward(x, param_slab):
    B = x.shape[0]
    grid_b = -(-B // TILE_B)
    Bp = grid_b * TILE_B
    xp = x if Bp == B else jnp.pad(x, ((0, Bp - B), (0, 0)))

    out = pl.pallas_call(
        gmvae_kernel,
        out_shape=jax.ShapeDtypeStruct((Bp, OUT_LANES), jnp.float32),
        grid=(grid_b,),
        in_specs=[
            pl.BlockSpec((TILE_B, INPUT_SIZE), lambda i: (i, 0)),
            # constant block index -> slab DMA'd once, stays VMEM-resident
            pl.BlockSpec((SLAB_ROWS, SLAB_LANES), lambda i: (0, 0)),
        ],
        out_specs=pl.BlockSpec((TILE_B, OUT_LANES), lambda i: (i, 0)),
        compiler_params=pltpu.CompilerParams(dimension_semantics=("parallel",)),
    )(xp, param_slab)
    out = out[:B]

    mu_x      = out[:, OUT_MUX:OUT_MUX + NLATENT]
    mu_w      = out[:, OUT_MUW:OUT_MUW + NPRIOR]
    logvar_x  = out[:, OUT_LVX:OUT_LVX + NLATENT]
    logvar_w  = out[:, OUT_LVW:OUT_LVW + NPRIOR]
    mu_px     = out[:, OUT_MUPX:OUT_MUPX + K * NLATENT].reshape(B, K, NLATENT).transpose(0, 2, 1)
    logvar_px = out[:, OUT_LVPX:OUT_LVPX + K * NLATENT].reshape(B, K, NLATENT).transpose(0, 2, 1)
    cat_flat  = out[:, OUT_CAT:OUT_CAT + NCAT]
    cat_out, pos = [], 0
    for w in CAT_WIDTHS:
        cat_out.append(cat_flat[:, pos:pos + w])
        pos += w
    con_out   = out[:, OUT_CON:OUT_CON + NCON]
    qz        = out[:, OUT_QZ:OUT_QZ + K]
    x_sample  = mu_x                                  # eval-mode reparameterize
    return (mu_x, logvar_x, mu_px, logvar_px, qz,
            cat_out, con_out, mu_w, logvar_w, x_sample)


# ----------------------- parameter packing (runs once) -----------------------
def pack_params(p):
    """Fold eval-BN into the following Linear, fuse heads / block-diag branches,
    pack one f32 (216, 128) slab."""
    def fold(bn):
        gamma, beta, mean, var = bn[0], bn[1], bn[2], bn[3]
        scale = gamma / jnp.sqrt(var + BN_EPS)
        shift = beta - mean * scale
        return scale, shift

    s0, t0   = fold(p["bn0"])
    s1, t1   = fold(p["bn1"])
    sd0, td0 = fold(p["bnd0"])
    sd1, td1 = fold(p["bnd1"])

    # fused 5-head (BN1 folded): mu_x | mu_w | logvar_x | logvar_w | qz
    whead = jnp.concatenate(
        [p["wmux"], p["wmuw"], p["wlvx"], p["wlvw"], p["wqz"]], axis=1)
    bhead = jnp.concatenate(
        [p["bmux"], p["bmuw"], p["blvx"], p["blvw"], p["bqz"]], axis=1)

    # block-diag A: [mu_x | mu_w] @ [[wd0, 0], [0, wh1]]
    wblka = np.zeros((BLKA_ROWS, BLKA_COLS), np.float32)
    wblka[0:NLATENT, 0:H1] = np.asarray(p["wd0"], np.float32)
    wblka[NLATENT:, H1:] = np.asarray(p["wh1"], np.float32)
    bblka = np.concatenate(
        [np.asarray(p["bd0"], np.float32), np.asarray(p["bh1"], np.float32)], axis=1)

    # block-diag B: [leaky(d_pre) | tanh(hp_pre)] @ [[wd1', 0], [0, wpx]]
    wd1_f = sd0[:, None] * p["wd1"]
    bd1_f = t_ = td0[None, :] @ p["wd1"] + p["bd1"]
    wpx = jnp.concatenate([p["wmupx"][i] for i in range(K)]
                          + [p["wlvpx"][i] for i in range(K)], axis=1)
    bpx = jnp.concatenate([p["bmupx"][i] for i in range(K)]
                          + [p["blvpx"][i] for i in range(K)], axis=1)
    wblkb = np.zeros((BLKB_ROWS, BLKB_COLS), np.float32)
    wblkb[0:H1, 0:H0] = np.asarray(wd1_f, np.float32)
    wblkb[H1:, H0:] = np.asarray(wpx, np.float32)
    bblkb = np.concatenate(
        [np.asarray(bd1_f, np.float32), np.asarray(bpx, np.float32)], axis=1)

    entries = {
        "we0": p["we0"], "be0": p["be0"],
        "we1": s0[:, None] * p["we1"], "be1": t0[None, :] @ p["we1"] + p["be1"],
        "whead": s1[:, None] * whead,  "bhead": t1[None, :] @ whead + bhead,
        "wblka": wblka, "bblka": bblka,
        "wblkb": wblkb, "bblkb": bblkb,
        "wout": sd1[:, None] * p["wout"], "bout": td1[None, :] @ p["wout"] + p["bout"],
    }

    slab = np.zeros((SLAB_ROWS, SLAB_LANES), np.float32)
    for name, (r, c, rows, cols) in SLAB_OFF.items():
        arr = np.asarray(entries[name], np.float32)
        assert arr.shape == (rows, cols), (name, arr.shape, (rows, cols))
        slab[r:r + rows, c:c + cols] = arr
    return jnp.asarray(slab)


# ------------------------- deterministic param init --------------------------
def init_params(key):
    keys = iter(jax.random.split(key, 128))

    def w(shape, scale=0.1):
        return scale * jax.random.normal(next(keys), shape, dtype=jnp.float32)

    def bn(n):
        gamma = 1.0 + 0.1 * jax.random.normal(next(keys), (1, n), jnp.float32)
        beta = 0.1 * jax.random.normal(next(keys), (1, n), jnp.float32)
        mean = 0.1 * jax.random.normal(next(keys), (1, n), jnp.float32)
        var = 1.0 + 0.1 * jnp.abs(jax.random.normal(next(keys), (1, n), jnp.float32))
        return jnp.concatenate([gamma, beta, mean, var], axis=0)  # (4, n)

    p = {}
    p["we0"], p["be0"], p["bn0"] = w((INPUT_SIZE, H0)), w((1, H0)), bn(H0)
    p["we1"], p["be1"], p["bn1"] = w((H0, H1)), w((1, H1)), bn(H1)
    p["wqz"], p["bqz"] = w((H1, K)), w((1, K))
    p["wmux"], p["bmux"] = w((H1, NLATENT)), w((1, NLATENT))
    p["wlvx"], p["blvx"] = w((H1, NLATENT)), w((1, NLATENT))
    p["wmuw"], p["bmuw"] = w((H1, NPRIOR)), w((1, NPRIOR))
    p["wlvw"], p["blvw"] = w((H1, NPRIOR)), w((1, NPRIOR))
    p["wh1"], p["bh1"] = w((NPRIOR, H1)), w((1, H1))
    p["wmupx"], p["bmupx"] = w((K, H1, NLATENT)), w((K, 1, NLATENT))
    p["wlvpx"], p["blvpx"] = w((K, H1, NLATENT)), w((K, 1, NLATENT))
    # decoder: zip([nlatent]+nhiddens[::-1], nhiddens[::-1]) -> (L,H1), (H1,H0)
    p["wd0"], p["bd0"], p["bnd0"] = w((NLATENT, H1)), w((1, H1)), bn(H1)
    p["wd1"], p["bd1"], p["bnd1"] = w((H1, H0)), w((1, H0)), bn(H0)
    p["wout"], p["bout"] = w((H0, INPUT_SIZE)), w((1, INPUT_SIZE))
    return p


# ------------------------- plain-JAX reference (check) -----------------------
def ref_forward(x, p):
    def lin(h, w, b):
        return h @ w + b

    h = _bn_eval(_leaky_relu(lin(x, p["we0"], p["be0"])), p["bn0"])
    h = _bn_eval(_leaky_relu(lin(h, p["we1"], p["be1"])), p["bn1"])
    qz = jax.nn.softmax(lin(h, p["wqz"], p["bqz"]), axis=1)
    mu_x = lin(h, p["wmux"], p["bmux"])
    logvar_x = lin(h, p["wlvx"], p["blvx"])
    mu_w = lin(h, p["wmuw"], p["bmuw"])
    logvar_w = lin(h, p["wlvw"], p["blvw"])
    w_s, x_s = mu_w, mu_x                             # eval-mode reparameterize
    hp = jnp.tanh(lin(w_s, p["wh1"], p["bh1"]))
    mu_px = jnp.stack([hp @ p["wmupx"][i] + p["bmupx"][i] for i in range(K)], axis=-1)
    lv_px = jnp.stack([hp @ p["wlvpx"][i] + p["blvpx"][i] for i in range(K)], axis=-1)
    d = _bn_eval(_leaky_relu(lin(x_s, p["wd0"], p["bd0"])), p["bnd0"])
    d = _bn_eval(_leaky_relu(lin(d, p["wd1"], p["bd1"])), p["bnd1"])
    recon = lin(d, p["wout"], p["bout"])
    cat_out, pos = [], 0
    for wdt in CAT_WIDTHS:
        cat_out.append(jax.nn.log_softmax(recon[:, pos:pos + wdt], axis=1))
        pos += wdt
    con_out = recon[:, NCAT:NCAT + NCON]
    return (mu_x, logvar_x, mu_px, lv_px, qz, cat_out, con_out,
            mu_w, logvar_w, x_s)


# ----------------------------------- main -------------------------------------
if __name__ == "__main__":
    key = jax.random.PRNGKey(0)
    kx, kp = jax.random.split(key)
    x = jax.random.normal(kx, (BATCH, INPUT_SIZE), dtype=jnp.float32)
    params = init_params(kp)
    slab = pack_params(params)            # once, outside jit / per-call path

    outs = gmvae_forward(x, slab)
    outs = jax.block_until_ready(outs)

    ref = ref_forward(x, params)
    flat_o, _ = jax.tree_util.tree_flatten(outs)
    flat_r, _ = jax.tree_util.tree_flatten(ref)
    for o, r in zip(flat_o, flat_r):
        assert o.shape == r.shape and o.dtype == r.dtype
        assert bool(jnp.all(jnp.isfinite(o)))
        np.testing.assert_allclose(np.asarray(o), np.asarray(r), rtol=5e-2, atol=5e-2)

    print("KERNEL_OK")
</pallas_src>

<mosaic_0001>
module attributes {stable_mosaic.version = 11 : i64} {
  func.func @gmvae_kernel(%arg0: i32, %arg1: memref<128x32xf32, #tpu.memory_space<vmem>>, %arg2: memref<216x128xf32, #tpu.memory_space<vmem>>, %arg3: memref<128x128xf32, #tpu.memory_space<vmem>>) attributes {dimension_semantics = [#tpu.dimension_semantics<parallel>], iteration_bounds = array<i64: 2>, scalar_prefetch = 0 : i64, scratch_operands = 0 : i64, tpu.core_type = #tpu.core_type<tc>, window_params = [{transform_indices = @transform_0, window_bounds = array<i64: 128, 32>}, {pipeline_mode = #tpu.pipeline_mode<synchronous>, transform_indices = @transform_1, window_bounds = array<i64: 216, 128>}, {transform_indices = @transform_2, window_bounds = array<i64: 128, 128>}]} {
    %c0 = arith.constant 0 : index
    %c0_0 = arith.constant 0 : index
    %0 = vector.load %arg1[%c0, %c0_0] : memref<128x32xf32, #tpu.memory_space<vmem>>, vector<128x32xf32>
    %c0_1 = arith.constant 0 : index
    %c0_2 = arith.constant 0 : index
    %1 = vector.load %arg2[%c0_1, %c0_2] : memref<216x128xf32, #tpu.memory_space<vmem>>, vector<32x32xf32>
    %cst = arith.constant dense<0.000000e+00> : vector<128x32xf32>
    %2 = tpu.matmul %0, %1, %cst {dimension_numbers = #tpu.dot_dimension_numbers<[1], [0], [0], [1], [0, 0, 1, 1], [], []>} : vector<128x32xf32>, vector<32x32xf32>, vector<128x32xf32> -> vector<128x32xf32>
    %c208 = arith.constant 208 : index
    %c0_3 = arith.constant 0 : index
    %3 = vector.load %arg2[%c208, %c0_3] : memref<216x128xf32, #tpu.memory_space<vmem>>, vector<1x32xf32>
    %4 = vector.broadcast %3 : vector<1x32xf32> to vector<128x32xf32>
    %5 = arith.addf %2, %4 : vector<128x32xf32>
    %cst_4 = arith.constant 0.000000e+00 : f32
    %6 = vector.broadcast %cst_4 : f32 to vector<128x32xf32>
    %7 = arith.cmpf ogt, %5, %6 : vector<128x32xf32>
    %cst_5 = arith.constant 0.00999999977 : f32
    %8 = vector.broadcast %cst_5 : f32 to vector<128x32xf32>
    %9 = arith.mulf %8, %5 : vector<128x32xf32>
    %10 = arith.select %7, %5, %9 : vector<128x32xi1>, vector<128x32xf32>
    %c32 = arith.constant 32 : index
    %c0_6 = arith.constant 0 : index
    %11 = vector.load %arg2[%c32, %c0_6] : memref<216x128xf32, #tpu.memory_space<vmem>>, vector<32x32xf32>
    %cst_7 = arith.constant dense<0.000000e+00> : vector<128x32xf32>
    %12 = tpu.matmul %10, %11, %cst_7 {dimension_numbers = #tpu.dot_dimension_numbers<[1], [0], [0], [1], [0, 0, 1, 1], [], []>} : vector<128x32xf32>, vector<32x32xf32>, vector<128x32xf32> -> vector<128x32xf32>
    %c209 = arith.constant 209 : index
    %c0_8 = arith.constant 0 : index
    %13 = vector.load %arg2[%c209, %c0_8] : memref<216x128xf32, #tpu.memory_space<vmem>>, vector<1x32xf32>
    %14 = vector.broadcast %13 : vector<1x32xf32> to vector<128x32xf32>
    %15 = arith.addf %12, %14 : vector<128x32xf32>
    %cst_9 = arith.constant 0.000000e+00 : f32
    %16 = vector.broadcast %cst_9 : f32 to vector<128x32xf32>
    %17 = arith.cmpf ogt, %15, %16 : vector<128x32xf32>
    %cst_10 = arith.constant 0.00999999977 : f32
    %18 = vector.broadcast %cst_10 : f32 to vector<128x32xf32>
    %19 = arith.mulf %18, %15 : vector<128x32xf32>
    %20 = arith.select %17, %15, %19 : vector<128x32xi1>, vector<128x32xf32>
    %c64 = arith.constant 64 : index
    %c0_11 = arith.constant 0 : index
    %21 = vector.load %arg2[%c64, %c0_11] : memref<216x128xf32, #tpu.memory_space<vmem>>, vector<32x35xf32>
    %cst_12 = arith.constant dense<0.000000e+00> : vector<128x35xf32>
    %22 = tpu.matmul %20, %21, %cst_12 {dimension_numbers = #tpu.dot_dimension_numbers<[1], [0], [0], [1], [0, 0, 1, 1], [], []>} : vector<128x32xf32>, vector<32x35xf32>, vector<128x35xf32> -> vector<128x35xf32>
    %c210 = arith.constant 210 : index
    %c0_13 = arith.constant 0 : index
    %23 = vector.load %arg2[%c210, %c0_13] : memref<216x128xf32, #tpu.memory_space<vmem>>, vector<1x35xf32>
    %24 = vector.broadcast %23 : vector<1x35xf32> to vector<128x35xf32>
    %25 = arith.addf %22, %24 : vector<128x35xf32>
    %26 = vector.extract_strided_slice %25 {offsets = [0, 32], sizes = [128, 3], strides = [1, 1]} : vector<128x35xf32> to vector<128x3xf32>
    %cst_14 = arith.constant dense<0xFF800000> : vector<128xf32>
    %27 = vector.multi_reduction <maximumf>, %26, %cst_14 [1] : vector<128x3xf32> to vector<128xf32>
    %28 = vector.shape_cast %27 : vector<128xf32> to vector<128x1xf32>
    %29 = vector.broadcast %28 : vector<128x1xf32> to vector<128x3xf32>
    %30 = arith.subf %26, %29 : vector<128x3xf32>
    %31 = math.exp %30 : vector<128x3xf32>
    %cst_15 = arith.constant dense<0.000000e+00> : vector<128xf32>
    %32 = vector.multi_reduction <add>, %31, %cst_15 [1] : vector<128x3xf32> to vector<128xf32>
    %33 = vector.shape_cast %32 : vector<128xf32> to vector<128x1xf32>
    %34 = tpu.reciprocal %33 {approx = true} : vector<128x1xf32> -> vector<128x1xf32>
    %35 = vector.broadcast %34 : vector<128x1xf32> to vector<128x3xf32>
    %36 = arith.mulf %31, %35 : vector<128x3xf32>
    %37 = vector.extract_strided_slice %25 {offsets = [0, 0], sizes = [128, 16], strides = [1, 1]} : vector<128x35xf32> to vector<128x16xf32>
    %c96 = arith.constant 96 : index
    %c0_16 = arith.constant 0 : index
    %38 = vector.load %arg2[%c96, %c0_16] : memref<216x128xf32, #tpu.memory_space<vmem>>, vector<16x64xf32>
    %cst_17 = arith.constant dense<0.000000e+00> : vector<128x64xf32>
    %39 = tpu.matmul %37, %38, %cst_17 {dimension_numbers = #tpu.dot_dimension_numbers<[1], [0], [0], [1], [0, 0, 1, 1], [], []>} : vector<128x16xf32>, vector<16x64xf32>, vector<128x64xf32> -> vector<128x64xf32>
    %c211 = arith.constant 211 : index
    %c0_18 = arith.constant 0 : index
    %40 = vector.load %arg2[%c211, %c0_18] : memref<216x128xf32, #tpu.memory_space<vmem>>, vector<1x64xf32>
    %41 = vector.broadcast %40 : vector<1x64xf32> to vector<128x64xf32>
    %42 = arith.addf %39, %41 : vector<128x64xf32>
    %43 = tpu.iota {dimensions = array<i32: 1>} : vector<128x64xi32>
    %c32_i32 = arith.constant 32 : i32
    %44 = vector.broadcast %c32_i32 : i32 to vector<128x64xi32>
    %45 = arith.cmpi slt, %43, %44 : vector<128x64xi32>
    %cst_19 = arith.constant 0.000000e+00 : f32
    %46 = vector.broadcast %cst_19 : f32 to vector<128x64xf32>
    %47 = arith.cmpf ogt, %42, %46 : vector<128x64xf32>
    %cst_20 = arith.constant 0.00999999977 : f32
    %48 = vector.broadcast %cst_20 : f32 to vector<128x64xf32>
    %49 = arith.mulf %48, %42 : vector<128x64xf32>
    %50 = arith.select %47, %42, %49 : vector<128x64xi1>, vector<128x64xf32>
    %51 = math.tanh %42 : vector<128x64xf32>
    %52 = arith.select %45, %50, %51 : vector<128x64xi1>, vector<128x64xf32>
    %c112 = arith.constant 112 : index
    %c0_21 = arith.constant 0 : index
    %53 = vector.load %arg2[%c112, %c0_21] : memref<216x128xf32, #tpu.memory_space<vmem>>, vector<64x80xf32>
    %cst_22 = arith.constant dense<0.000000e+00> : vector<128x80xf32>
    %54 = tpu.matmul %52, %53, %cst_22 {dimension_numbers = #tpu.dot_dimension_numbers<[1], [0], [0], [1], [0, 0, 1, 1], [], []>} : vector<128x64xf32>, vector<64x80xf32>, vector<128x80xf32> -> vector<128x80xf32>
    %c212 = arith.constant 212 : index
    %c0_23 = arith.constant 0 : index
    %55 = vector.load %arg2[%c212, %c0_23] : memref<216x128xf32, #tpu.memory_space<vmem>>, vector<1x80xf32>
    %56 = vector.broadcast %55 : vector<1x80xf32> to vector<128x80xf32>
    %57 = arith.addf %54, %56 : vector<128x80xf32>
    %58 = vector.extract_strided_slice %57 {offsets = [0, 0], sizes = [128, 32], strides = [1, 1]} : vector<128x80xf32> to vector<128x32xf32>
    %cst_24 = arith.constant 0.000000e+00 : f32
    %59 = vector.broadcast %cst_24 : f32 to vector<128x32xf32>
    %60 = arith.cmpf ogt, %58, %59 : vector<128x32xf32>
    %cst_25 = arith.constant 0.00999999977 : f32
    %61 = vector.broadcast %cst_25 : f32 to vector<128x32xf32>
    %62 = arith.mulf %61, %58 : vector<128x32xf32>
    %63 = arith.select %60, %58, %62 : vector<128x32xi1>, vector<128x32xf32>
    %64 = vector.extract_strided_slice %57 {offsets = [0, 32], sizes = [128, 48], strides = [1, 1]} : vector<128x80xf32> to vector<128x48xf32>
    %c176 = arith.constant 176 : index
    %c0_26 = arith.constant 0 : index
    %65 = vector.load %arg2[%c176, %c0_26] : memref<216x128xf32, #tpu.memory_space<vmem>>, vector<32x32xf32>
    %cst_27 = arith.constant dense<0.000000e+00> : vector<128x32xf32>
    %66 = tpu.matmul %63, %65, %cst_27 {dimension_numbers = #tpu.dot_dimension_numbers<[1], [0], [0], [1], [0, 0, 1, 1], [], []>} : vector<128x32xf32>, vector<32x32xf32>, vector<128x32xf32> -> vector<128x32xf32>
    %c213 = arith.constant 213 : index
    %c0_28 = arith.constant 0 : index
    %67 = vector.load %arg2[%c213, %c0_28] : memref<216x128xf32, #tpu.memory_space<vmem>>, vector<1x32xf32>
    %68 = vector.broadcast %67 : vector<1x32xf32> to vector<128x32xf32>
    %69 = arith.addf %66, %68 : vector<128x32xf32>
    %70 = vector.extract_strided_slice %69 {offsets = [0, 0], sizes = [128, 8], strides = [1, 1]} : vector<128x32xf32> to vector<128x8xf32>
    %cst_29 = arith.constant dense<0xFF800000> : vector<128xf32>
    %71 = vector.multi_reduction <maximumf>, %70, %cst_29 [1] : vector<128x8xf32> to vector<128xf32>
    %72 = vector.shape_cast %71 : vector<128xf32> to vector<128x1xf32>
    %73 = vector.broadcast %72 : vector<128x1xf32> to vector<128x8xf32>
    %74 = arith.subf %70, %73 : vector<128x8xf32>
    %75 = math.exp %74 : vector<128x8xf32>
    %cst_30 = arith.constant dense<0.000000e+00> : vector<128xf32>
    %76 = vector.multi_reduction <add>, %75, %cst_30 [1] : vector<128x8xf32> to vector<128xf32>
    %77 = vector.shape_cast %76 : vector<128xf32> to vector<128x1xf32>
    %78 = math.log %77 : vector<128x1xf32>
    %79 = arith.addf %72, %78 : vector<128x1xf32>
    %80 = vector.broadcast %79 : vector<128x1xf32> to vector<128x8xf32>
    %81 = arith.subf %70, %80 : vector<128x8xf32>
    %82 = vector.extract_strided_slice %69 {offsets = [0, 8], sizes = [128, 8], strides = [1, 1]} : vector<128x32xf32> to vector<128x8xf32>
    %cst_31 = arith.constant dense<0xFF800000> : vector<128xf32>
    %83 = vector.multi_reduction <maximumf>, %82, %cst_31 [1] : vector<128x8xf32> to vector<128xf32>
    %84 = vector.shape_cast %83 : vector<128xf32> to vector<128x1xf32>
    %85 = vector.broadcast %84 : vector<128x1xf32> to vector<128x8xf32>
    %86 = arith.subf %82, %85 : vector<128x8xf32>
    %87 = math.exp %86 : vector<128x8xf32>
    %cst_32 = arith.constant dense<0.000000e+00> : vector<128xf32>
    %88 = vector.multi_reduction <add>, %87, %cst_32 [1] : vector<128x8xf32> to vector<128xf32>
    %89 = vector.shape_cast %88 : vector<128xf32> to vector<128x1xf32>
    %90 = math.log %89 : vector<128x1xf32>
    %91 = arith.addf %84, %90 : vector<128x1xf32>
    %92 = vector.broadcast %91 : vector<128x1xf32> to vector<128x8xf32>
    %93 = arith.subf %82, %92 : vector<128x8xf32>
    %94 = vector.extract_strided_slice %69 {offsets = [0, 16], sizes = [128, 16], strides = [1, 1]} : vector<128x32xf32> to vector<128x16xf32>
    %cst_33 = arith.constant 0.000000e+00 : f32
    %95 = vector.broadcast %cst_33 : f32 to vector<128x13xf32>
    %96 = vector.extract_strided_slice %25 {offsets = [0, 0], sizes = [128, 32], strides = [1, 1]} : vector<128x35xf32> to vector<128x32xf32>
    %97 = tpu.concatenate %96, %64, %81, %93, %94, %36, %95 in 1 : vector<128x32xf32>, vector<128x48xf32>, vector<128x8xf32>, vector<128x8xf32>, vector<128x16xf32>, vector<128x3xf32>, vector<128x13xf32> -> vector<128x128xf32>
    %c0_34 = arith.constant 0 : index
    %c0_35 = arith.constant 0 : index
    %98 = vector.load %arg3[%c0_34, %c0_35] : memref<128x128xf32, #tpu.memory_space<vmem>>, vector<128x128xf32>
    tpu.vector_store %arg3[%c0_34, %c0_35], %97 {strides = array<i32>} : memref<128x128xf32, #tpu.memory_space<vmem>>, vector<128x128xf32>,
    return
  }
  func.func @transform_0(%arg0: i32) -> (i32, i32) {
    %c0_i32 = arith.constant 0 : i32
    %c0_i32_0 = arith.constant 0 : i32
    return %arg0, %c0_i32 : i32, i32
  }
  func.func @transform_1(%arg0: i32) -> (i32, i32) {
    %c0_i32 = arith.constant 0 : i32
    %c0_i32_0 = arith.constant 0 : i32
    %c0_i32_1 = arith.constant 0 : i32
    return %c0_i32, %c0_i32_0 : i32, i32
  }
  func.func @transform_2(%arg0: i32) -> (i32, i32) {
    %c0_i32 = arith.constant 0 : i32
    %c0_i32_0 = arith.constant 0 : i32
    return %arg0, %c0_i32 : i32, i32
  }
}

</mosaic_0001>

<llo_original>
// kernel: gmvae_forward.1
$region0: #{gmvae_forward.1}
  #allocation0 [shape = 'u32[]', space=smem, size = 0x4, offset = 0x4, fixed_abs, tag = 'smem constant byte address 0x4 - core index']
  #allocation1 [shape = 'u32[144,128]{1,0:T(1,128)}', space=vmem, size = 0x12000, scoped, tag = 'internal scratch']
  %s0 = inlined_call_operand.vmem [shape: f32[256,32], index: 0, kind: input, shape index: {}]
  %s1 = inlined_call_operand.vmem [shape: f32[216,128], index: 1, kind: input, shape index: {}]
  %s2 = inlined_call_operand.vmem [shape: f32[256,128], index: 2, kind: output, shape index: {}]
  %s3 = sld [smem:[#allocation0]]
  $region41: #{gmvae_forward.1} parent=0
    _
  %s5 = ssub.s32 1, %s3
  %s6 = scalar_select 0, %s5, %s3
  loop: start=0, step=1, limit=4
  $region2: #{gmvae_forward.1} parent=0 // loop_pre_header
    _
  $region3: #{gmvae_forward.1} parent=0 // loop_header
    %s8 = sphi 0, %s12
    %p9 = scmp.ge.s32.totalorder %s8, 4
    %s18 = sphi 0, %s20
    %s21 = sphi 0, %s18
    %s22 = sphi 0, %s21
    %s38 = sphi 0, %s22
    %s42 = sphi 0, %s42
    %s44 = sphi 0, %s42
    %s45 = sphi 0, %s44
    %s59 = sphi 0, %s45
    %s65 = sphi 0, %s67
    %s68 = sphi 0, %s65
    %s69 = sphi 0, %s68
    %s85 = sphi 0, %s69
  $region4: #{gmvae_forward.1} parent=0 // loop_header_branch
    %11 = sbr.rel (%p9) target = $region8
  $region5: #{gmvae_forward.1} parent=0 // loop_body
    %s13 = ssub.s32 %s8, 1
    %s14 = ssub.s32 %s8, 2
    %s15 = sadd.s32 %s8, 1
    %s16 = ssub.s32 %s8, %s15
    %p17 = scmp.eq.s32.totalorder %s16, 0
    %s19 = sadd.s32 %s18, 1
    %s20 = scalar_select %p17, %s18, %s19
    %p23 = pneg %p17
    %p24 = scmp.eq.s32.totalorder %s8, 1
    %p25 = por %p23, %p24
    %p26 = scmp.ne.s32.totalorder %s18, %s21
    %p27 = scmp.eq.s32.totalorder %s8, 0
    %p28 = por %p26, %p27
    %p29 = scmp.ne.s32.totalorder %s18, %s21
    %p30 = scmp.eq.s32.totalorder %s13, 1
    %p31 = por %p29, %p30
    %p32 = scmp.ne.s32.totalorder %s21, %s22
    %p33 = scmp.eq.s32.totalorder %s13, 0
    %p34 = por %p32, %p33
    %p35 = scmp.ne.s32.totalorder %s21, %s22
    %p36 = scmp.eq.s32.totalorder %s14, 1
    %p37 = por %p35, %p36
    %p39 = scmp.ne.s32.totalorder %s22, %s38
    %p40 = scmp.eq.s32.totalorder %s14, 0
    %p41 = por %p39, %p40
    %s43 = sadd.s32 %s42, 1
    %p46 = scmp.eq.s32.totalorder %s8, 1
    %p47 = scmp.ne.s32.totalorder %s42, %s44
    %p48 = scmp.eq.s32.totalorder %s8, 0
    %p49 = por %p47, %p48
    %p50 = scmp.ne.s32.totalorder %s42, %s44
    %p51 = scmp.eq.s32.totalorder %s13, 1
    %p52 = por %p50, %p51
    %p53 = scmp.ne.s32.totalorder %s44, %s45
    %p54 = scmp.eq.s32.totalorder %s13, 0
    %p55 = por %p53, %p54
    %p56 = scmp.ne.s32.totalorder %s44, %s45
    %p57 = scmp.eq.s32.totalorder %s14, 1
    %p58 = por %p56, %p57
    %p60 = scmp.ne.s32.totalorder %s45, %s59
    %p61 = scmp.eq.s32.totalorder %s14, 0
    %p62 = por %p60, %p61
    %s63 = ssub.s32 %s8, %s15
    %p64 = scmp.eq.s32.totalorder %s63, 0
    %s66 = sadd.s32 %s65, 1
    %s67 = scalar_select %p64, %s65, %s66
    %p70 = pneg %p64
    %p71 = scmp.eq.s32.totalorder %s8, 1
    %p72 = por %p70, %p71
    %p73 = scmp.ne.s32.totalorder %s65, %s68
    %p74 = scmp.eq.s32.totalorder %s8, 0
    %p75 = por %p73, %p74
    %p76 = scmp.ne.s32.totalorder %s65, %s68
    %p77 = scmp.eq.s32.totalorder %s13, 1
    %p78 = por %p76, %p77
    %p79 = scmp.ne.s32.totalorder %s68, %s69
    %p80 = scmp.eq.s32.totalorder %s13, 0
    %p81 = por %p79, %p80
    %p82 = scmp.ne.s32.totalorder %s68, %s69
    %p83 = scmp.eq.s32.totalorder %s14, 1
    %p84 = por %p82, %p83
    %p86 = scmp.ne.s32.totalorder %s69, %s85
    %p87 = scmp.eq.s32.totalorder %s14, 0
    %p88 = por %p86, %p87
    %p89 = scmp.le.s32.totalorder 1, %s8
    %p90 = scmp.lt.s32.totalorder %s8, 3
    %p91 = pnand %p89, %p90
    %p92 = pneg %p91
    // Predicated region
    $region9: #{gmvae_forward.1} parent=5 // pred_check
      _
    $region10: #{gmvae_forward.1} parent=5 // pred_check_branch
      %94 = sbr.rel (%p91) target = $region12
    $region11: #{gmvae_forward.1} parent=5 // pred_region
      %s95 = ssub.s32 %s8, 1
      // Predicated region
      $region13: #{gmvae_forward.1} parent=11 // pred_check
        %p96 = pneg %p55
      $region14: #{gmvae_forward.1} parent=11 // pred_check_branch
        %98 = sbr.rel (%p96) target = $region16
      $region15: #{gmvae_forward.1} parent=11 // pred_region
        _
      $region16: #{gmvae_forward.1} parent=11 // pred_fallthru
        _
    $region12: #{gmvae_forward.1} parent=5 // pred_fallthru
      _
    %p99 = scmp.lt.s32.totalorder %s8, 2
    // Predicated region
    $region17: #{gmvae_forward.1} parent=5 // pred_check
      %p100 = pneg %p99
    $region18: #{gmvae_forward.1} parent=5 // pred_check_branch
      %102 = sbr.rel (%p100) target = $region20
    $region19: #{gmvae_forward.1} parent=5 // pred_region
      // Predicated region
      $region21: #{gmvae_forward.1} parent=19 // pred_check
        %p103 = pneg %p28
      $region22: #{gmvae_forward.1} parent=19 // pred_check_branch
        %105 = sbr.rel (%p103) target = $region24
      $region23: #{gmvae_forward.1} parent=19 // pred_region
        %s106 = smul.u32 16, %s8
        %p107 = scmp.lt.s32.totalorder %s106, 31
        %s108 = scalar_select %p107, %s106, 31
        %s109 = smul.addr %s108, 8
        %s110 = scalar_lea.vmem %s0, %s109
        %s111 = smul.u32 16, %s8
      $region24: #{gmvae_forward.1} parent=19 // pred_fallthru
        _
    $region20: #{gmvae_forward.1} parent=5 // pred_fallthru
      _
    %p112 = scmp.le.s32.totalorder 1, %s8
    %p113 = scmp.lt.s32.totalorder %s8, 3
    %p114 = pnand %p112, %p113
    %p115 = pneg %p114
    // Predicated region
    $region25: #{gmvae_forward.1} parent=5 // pred_check
      _
    $region26: #{gmvae_forward.1} parent=5 // pred_check_branch
      %117 = sbr.rel (%p114) target = $region28
    $region27: #{gmvae_forward.1} parent=5 // pred_region
      %s118 = ssub.s32 %s8, 1
      %s119 = smul.u32 16, %s13
      %p120 = scmp.lt.s32.totalorder %s119, 31
      %s121 = scalar_select %p120, %s119, 31
      %s122 = smul.addr %s121, 8
      %s123 = scalar_lea.vmem %s0, %s122
      %p124 = pneg %p34
      %p125 = pneg %p31
      %p126 = pneg %p55
      %p127 = pneg %p52
      %p128 = pneg %p81
      %p129 = pneg %p78
      %s130 = smul.u32 16, %s13
      %p131 = scmp.lt.s32.totalorder %s130, 31
      %s132 = scalar_select %p131, %s130, 31
      %s133 = smul.addr %s132, 8
      %s134 = scalar_lea.vmem %s2, %s133
      %s135 = smul.u32 16, %s13
      %p136 = scmp.lt.s32.totalorder %s135, 31
      %s137 = scalar_select %p136, %s135, 31
      %s138 = smul.addr %s137, 8
      %s139 = scalar_lea.vmem %s0, %s138
      %s140 = smul.u32 16, %s13
      %s141 = smul.u32 16, %s13
      %p142 = scmp.lt.s32.totalorder %s141, 31
      %s143 = scalar_select %p142, %s141, 31
      %s144 = smul.addr %s143, 8
      %s145 = scalar_lea.vmem %s2, %s144
      %s146 = smul.u32 16, %s13
      %v147 = vld [vmem:[%s139] sm:$0xff]
      %v148 = vld [vmem:[%s139 + $0x8] sm:$0xff]
      %v149 = vld [vmem:[%s139 + $0x10] sm:$0xff]
      %v150 = vld [vmem:[%s139 + $0x18] sm:$0xff]
      %v151 = vld [vmem:[%s139 + $0x20] sm:$0xff]
      %v152 = vld [vmem:[%s139 + $0x28] sm:$0xff]
      %v153 = vld [vmem:[%s139 + $0x30] sm:$0xff]
      %v154 = vld [vmem:[%s139 + $0x38] sm:$0xff]
      %v155 = vld [vmem:[%s139 + $0x40] sm:$0xff]
      %v156 = vld [vmem:[%s139 + $0x48] sm:$0xff]
      %v157 = vld [vmem:[%s139 + $0x50] sm:$0xff]
      %v158 = vld [vmem:[%s139 + $0x58] sm:$0xff]
      %v159 = vld [vmem:[%s139 + $0x60] sm:$0xff]
      %v160 = vld [vmem:[%s139 + $0x68] sm:$0xff]
      %v161 = vld [vmem:[%s139 + $0x70] sm:$0xff]
      %v162 = vld [vmem:[%s139 + $0x78] sm:$0xff]
      %v163 = vld [vmem:[%s1] sm:$0xff]
      %v164 = vld [vmem:[%s1 + $0x8] sm:$0xff]
      %v165 = vld [vmem:[%s1 + $0x10] sm:$0xff]
      %v166 = vld [vmem:[%s1 + $0x18] sm:$0xff]
      %v167 = vld [vmem:[%s1 + $0xd0] sm:$0x1]
      %v168 = vlaneseq
      %v169 = vshrl.u32 %v168, 7
      %v170 = vsub.s32 0, %v169
      %v171 = vrot.slane %v167, %v170
      %vm172 = vcmask 261120
      %v174 = vsel %vm172, %v147, 0
      %v177 = vsel %vm172, %v148, 0
      %v180 = vsel %vm172, %v149, 0
      %v183 = vsel %vm172, %v150, 0
      %v186 = vsel %vm172, %v151, 0
      %v189 = vsel %vm172, %v152, 0
      %v192 = vsel %vm172, %v153, 0
      %v195 = vsel %vm172, %v154, 0
      %v198 = vsel %vm172, %v155, 0
      %v201 = vsel %vm172, %v156, 0
      %v204 = vsel %vm172, %v157, 0
      %v207 = vsel %vm172, %v158, 0
      %v210 = vsel %vm172, %v159, 0
      %v213 = vsel %vm172, %v160, 0
      %v216 = vsel %vm172, %v161, 0
      %v219 = vsel %vm172, %v162, 0
      %221 = vmatprep.subr.mxu0 0.0
      %222 = vmatpush1.msra.mxu0 %v163
      %223 = vmatprep.subr.mxu0 0.0
      %224 = vmatpush1.msra.mxu0 %v164
      %225 = vmatprep.subr.mxu0 0.0
      %226 = vmatpush1.msra.mxu0 %v165
      %227 = vmatprep.subr.mxu0 0.0
      %228 = vmatpush1.msra.mxu0 %v166
      %229 = vmatprep.subr.mxu0 0.0
      %230 = vmatpush1.msra.mxu0 0.0
      %231 = vmatprep.subr.mxu0 0.0
      %232 = vmatpush1.msra.mxu0 0.0
      %233 = vmatprep.subr.mxu0 0.0
      %234 = vmatpush1.msra.mxu0 0.0
      %235 = vmatprep.subr.mxu0 0.0
      %236 = vmatpush1.msra.mxu0 0.0
      %237 = vmatprep.subr.mxu0 0.0
      %238 = vmatpush1.msra.mxu0 0.0
      %239 = vmatprep.subr.mxu0 0.0
      %240 = vmatpush1.msra.mxu0 0.0
      %241 = vmatprep.subr.mxu0 0.0
      %242 = vmatpush1.msra.mxu0 0.0
      %243 = vmatprep.subr.mxu0 0.0
      %244 = vmatpush1.msra.mxu0 0.0
      %245 = vmatprep.subr.mxu0 0.0
      %246 = vmatpush1.msra.mxu0 0.0
      %247 = vmatprep.subr.mxu0 0.0
      %248 = vmatpush1.msra.mxu0 0.0
      %249 = vmatprep.subr.mxu0 0.0
      %250 = vmatpush1.msra.mxu0 0.0
      %251 = vmatprep.subr.mxu0 0.0
      %252 = vmatpush1.msra.mxu0 0.0
      %253 = vmatprep.subr.mxu0 0.0
      %254 = vmatpush1.msra.mxu0 0.0
      %255 = vmatprep.subr.mxu0 0.0
      %256 = vmatpush1.msra.mxu0 0.0
      %257 = vmatprep.subr.mxu0 0.0
      %258 = vmatpush1.msra.mxu0 0.0
      %259 = vmatprep.subr.mxu0 0.0
      %260 = vmatpush1.msra.mxu0 0.0
      %261 = vmatprep.subr.mxu0 0.0
      %262 = vmatpush1.msra.mxu0 0.0
      %263 = vmatprep.subr.mxu0 0.0
      %264 = vmatpush1.msra.mxu0 0.0
      %265 = vmatprep.subr.mxu0 0.0
      %266 = vmatpush1.msra.mxu0 0.0
      %267 = vmatprep.subr.mxu0 0.0
      %268 = vmatpush1.msra.mxu0 0.0
      %269 = vmatprep.subr.mxu0 0.0
      %270 = vmatpush1.msra.mxu0 0.0
      %271 = vmatprep.subr.mxu0 0.0
      %272 = vmatpush1.msra.mxu0 0.0
      %273 = vmatprep.subr.mxu0 0.0
      %274 = vmatpush1.msra.mxu0 0.0
      %275 = vmatprep.subr.mxu0 0.0
      %276 = vmatpush1.msra.mxu0 0.0
      %277 = vmatprep.subr.mxu0 0.0
      %278 = vmatpush1.msra.mxu0 0.0
      %279 = vmatprep.subr.mxu0 0.0
      %280 = vmatpush1.msra.mxu0 0.0
      %281 = vmatprep.subr.mxu0 0.0
      %282 = vmatpush1.msra.mxu0 0.0
      %283 = vmatprep.subr.mxu0 0.0
      %284 = vmatpush1.msra.mxu0 0.0
      %285 = vmatprep.mubr.f32.mxu0 0.0
      %286 = vmatmul.mubr.f32.gmra.mrb[0].mxu0 %v174
      %v287 = vpop.f32.mrb[0].mxu0
      %v288 = vadd.f32 %v171, %v287
      %v289 = vpop.f32.mrb[0].mxu0
      %290 = vmatprep.mubr.f32.mxu0 0.0
      %291 = vmatmul.mubr.f32.gmra.mrb[0].mxu0 %v177
      %v292 = vpop.f32.mrb[0].mxu0
      %v293 = vadd.f32 %v171, %v292
      %v294 = vpop.f32.mrb[0].mxu0
      %295 = vmatprep.mubr.f32.mxu0 0.0
      %296 = vmatmul.mubr.f32.gmra.mrb[0].mxu0 %v180
      %v297 = vpop.f32.mrb[0].mxu0
      %v298 = vadd.f32 %v171, %v297
      %v299 = vpop.f32.mrb[0].mxu0
      %300 = vmatprep.mubr.f32.mxu0 0.0
      %301 = vmatmul.mubr.f32.gmra.mrb[0].mxu0 %v183
      %v302 = vpop.f32.mrb[0].mxu0
      %v303 = vadd.f32 %v171, %v302
      %v304 = vpop.f32.mrb[0].mxu0
      %305 = vmatprep.mubr.f32.mxu0 0.0
      %306 = vmatmul.mubr.f32.gmra.mrb[0].mxu0 %v186
      %v307 = vpop.f32.mrb[0].mxu0
      %v308 = vadd.f32 %v171, %v307
      %v309 = vpop.f32.mrb[0].mxu0
      %310 = vmatprep.mubr.f32.mxu0 0.0
      %311 = vmatmul.mubr.f32.gmra.mrb[0].mxu0 %v189
      %v312 = vpop.f32.mrb[0].mxu0
      %v313 = vadd.f32 %v171, %v312
      %v314 = vpop.f32.mrb[0].mxu0
      %315 = vmatprep.mubr.f32.mxu0 0.0
      %316 = vmatmul.mubr.f32.gmra.mrb[0].mxu0 %v192
      %v317 = vpop.f32.mrb[0].mxu0
      %v318 = vadd.f32 %v171, %v317
      %v319 = vpop.f32.mrb[0].mxu0
      %320 = vmatprep.mubr.f32.mxu0 0.0
      %321 = vmatmul.mubr.f32.gmra.mrb[0].mxu0 %v195
      %v322 = vpop.f32.mrb[0].mxu0
      %v323 = vadd.f32 %v171, %v322
      %v324 = vpop.f32.mrb[0].mxu0
      %325 = vmatprep.mubr.f32.mxu0 0.0
      %326 = vmatmul.mubr.f32.gmra.mrb[0].mxu0 %v198
      %v327 = vpop.f32.mrb[0].mxu0
      %v328 = vadd.f32 %v171, %v327
      %v329 = vpop.f32.mrb[0].mxu0
      %330 = vmatprep.mubr.f32.mxu0 0.0
      %331 = vmatmul.mubr.f32.gmra.mrb[0].mxu0 %v201
      %v332 = vpop.f32.mrb[0].mxu0
      %v333 = vadd.f32 %v171, %v332
      %v334 = vpop.f32.mrb[0].mxu0
      %335 = vmatprep.mubr.f32.mxu0 0.0
      %336 = vmatmul.mubr.f32.gmra.mrb[0].mxu0 %v204
      %v337 = vpop.f32.mrb[0].mxu0
      %v338 = vadd.f32 %v171, %v337
      %v339 = vpop.f32.mrb[0].mxu0
      %340 = vmatprep.mubr.f32.mxu0 0.0
      %341 = vmatmul.mubr.f32.gmra.mrb[0].mxu0 %v207
      %v342 = vpop.f32.mrb[0].mxu0
      %v343 = vadd.f32 %v171, %v342
      %v344 = vpop.f32.mrb[0].mxu0
      %345 = vmatprep.mubr.f32.mxu0 0.0
      %346 = vmatmul.mubr.f32.gmra.mrb[0].mxu0 %v210
      %v347 = vpop.f32.mrb[0].mxu0
      %v348 = vadd.f32 %v171, %v347
      %v349 = vpop.f32.mrb[0].mxu0
      %350 = vmatprep.mubr.f32.mxu0 0.0
      %351 = vmatmul.mubr.f32.gmra.mrb[0].mxu0 %v213
      %v352 = vpop.f32.mrb[0].mxu0
      %v353 = vadd.f32 %v171, %v352
      %v354 = vpop.f32.mrb[0].mxu0
      %355 = vmatprep.mubr.f32.mxu0 0.0
      %356 = vmatmul.mubr.f32.gmra.mrb[0].mxu0 %v216
      %v357 = vpop.f32.mrb[0].mxu0
      %v358 = vadd.f32 %v171, %v357
      %v359 = vpop.f32.mrb[0].mxu0
      %360 = vmatprep.mubr.f32.mxu0 0.0
      %361 = vmatmul.mubr.f32.gmra.mrb[0].mxu0 %v219
      %v362 = vpop.f32.mrb[0].mxu0
      %v363 = vadd.f32 %v171, %v362
      %v364 = vpop.f32.mrb[0].mxu0
      %365 = vdwg.mxu0
      %vm366 = vcmp.gt.f32.partialorder %v288, 0.0
      %vm367 = vcmp.gt.f32.partialorder %v293, 0.0
      %vm368 = vcmp.gt.f32.partialorder %v298, 0.0
      %vm369 = vcmp.gt.f32.partialorder %v303, 0.0
      %vm370 = vcmp.gt.f32.partialorder %v308, 0.0
      %vm371 = vcmp.gt.f32.partialorder %v313, 0.0
      %vm372 = vcmp.gt.f32.partialorder %v318, 0.0
      %vm373 = vcmp.gt.f32.partialorder %v323, 0.0
      %vm374 = vcmp.gt.f32.partialorder %v328, 0.0
      %vm375 = vcmp.gt.f32.partialorder %v333, 0.0
      %vm376 = vcmp.gt.f32.partialorder %v338, 0.0
      %vm377 = vcmp.gt.f32.partialorder %v343, 0.0
      %vm378 = vcmp.gt.f32.partialorder %v348, 0.0
      %vm379 = vcmp.gt.f32.partialorder %v353, 0.0
      %vm380 = vcmp.gt.f32.partialorder %v358, 0.0
      %vm381 = vcmp.gt.f32.partialorder %v363, 0.0
      %v382 = vmul.f32 %v288, 0.01
      %v383 = vmul.f32 %v293, 0.01
      %v384 = vmul.f32 %v298, 0.01
      %v385 = vmul.f32 %v303, 0.01
      %v386 = vmul.f32 %v308, 0.01
      %v387 = vmul.f32 %v313, 0.01
      %v388 = vmul.f32 %v318, 0.01
      %v389 = vmul.f32 %v323, 0.01
      %v390 = vmul.f32 %v328, 0.01
      %v391 = vmul.f32 %v333, 0.01
      %v392 = vmul.f32 %v338, 0.01
      %v393 = vmul.f32 %v343, 0.01
      %v394 = vmul.f32 %v348, 0.01
      %v395 = vmul.f32 %v353, 0.01
      %v396 = vmul.f32 %v358, 0.01
      %v397 = vmul.f32 %v363, 0.01
      %v398 = vsel %vm366, %v288, %v382
      %v399 = vsel %vm367, %v293, %v383
      %v400 = vsel %vm368, %v298, %v384
      %v401 = vsel %vm369, %v303, %v385
      %v402 = vsel %vm370, %v308, %v386
      %v403 = vsel %vm371, %v313, %v387
      %v404 = vsel %vm372, %v318, %v388
      %v405 = vsel %vm373, %v323, %v389
      %v406 = vsel %vm374, %v328, %v390
      %v407 = vsel %vm375, %v333, %v391
      %v408 = vsel %vm376, %v338, %v392
      %v409 = vsel %vm377, %v343, %v393
      %v410 = vsel %vm378, %v348, %v394
      %v411 = vsel %vm379, %v353, %v395
      %v412 = vsel %vm380, %v358, %v396
      %v413 = vsel %vm381, %v363, %v397
      %v414 = vld [vmem:[%s1 + $0x20] sm:$0xff]
      %v415 = vld [vmem:[%s1 + $0x28] sm:$0xff]
      %v416 = vld [vmem:[%s1 + $0x30] sm:$0xff]
      %v417 = vld [vmem:[%s1 + $0x38] sm:$0xff]
      %v418 = vld [vmem:[%s1 + $0xd1] sm:$0x1]
      %v419 = vlaneseq
      %v420 = vshrl.u32 %v419, 7
      %v421 = vsub.s32 0, %v420
      %v422 = vrot.slane %v418, %v421
      %v424 = vsel %vm172, %v398, 0
      %v427 = vsel %vm172, %v399, 0
      %v430 = vsel %vm172, %v400, 0
      %v433 = vsel %vm172, %v401, 0
      %v436 = vsel %vm172, %v402, 0
      %v439 = vsel %vm172, %v403, 0
      %v442 = vsel %vm172, %v404, 0
      %v445 = vsel %vm172, %v405, 0
      %v448 = vsel %vm172, %v406, 0
      %v451 = vsel %vm172, %v407, 0
      %v454 = vsel %vm172, %v408, 0
      %v457 = vsel %vm172, %v409, 0
      %v460 = vsel %vm172, %v410, 0
      %v463 = vsel %vm172, %v411, 0
      %v466 = vsel %vm172, %v412, 0
      %v469 = vsel %vm172, %v413, 0
      %471 = vmatprep.subr.mxu0 0.0
      %472 = vmatpush1.msra.mxu0 %v414
      %473 = vmatprep.subr.mxu0 0.0
      %474 = vmatpush1.msra.mxu0 %v415
      %475 = vmatprep.subr.mxu0 0.0
      %476 = vmatpush1.msra.mxu0 %v416
      %477 = vmatprep.subr.mxu0 0.0
      %478 = vmatpush1.msra.mxu0 %v417
      %479 = vmatprep.subr.mxu0 0.0
      %480 = vmatpush1.msra.mxu0 0.0
      %481 = vmatprep.subr.mxu0 0.0
      %482 = vmatpush1.msra.mxu0 0.0
      %483 = vmatprep.subr.mxu0 0.0
      %484 = vmatpush1.msra.mxu0 0.0
      %485 = vmatprep.subr.mxu0 0.0
      %486 = vmatpush1.msra.mxu0 0.0
      %487 = vmatprep.subr.mxu0 0.0
      %488 = vmatpush1.msra.mxu0 0.0
      %489 = vmatprep.subr.mxu0 0.0
      %490 = vmatpush1.msra.mxu0 0.0
      %491 = vmatprep.subr.mxu0 0.0
      %492 = vmatpush1.msra.mxu0 0.0
      %493 = vmatprep.subr.mxu0 0.0
      %494 = vmatpush1.msra.mxu0 0.0
      %495 = vmatprep.subr.mxu0 0.0
      %496 = vmatpush1.msra.mxu0 0.0
      %497 = vmatprep.subr.mxu0 0.0
      %498 = vmatpush1.msra.mxu0 0.0
      %499 = vmatprep.subr.mxu0 0.0
      %500 = vmatpush1.msra.mxu0 0.0
      %501 = vmatprep.subr.mxu0 0.0
      %502 = vmatpush1.msra.mxu0 0.0
      %503 = vmatprep.subr.mxu0 0.0
      %504 = vmatpush1.msra.mxu0 0.0
      %505 = vmatprep.subr.mxu0 0.0
      %506 = vmatpush1.msra.mxu0 0.0
      %507 = vmatprep.subr.mxu0 0.0
      %508 = vmatpush1.msra.mxu0 0.0
      %509 = vmatprep.subr.mxu0 0.0
      %510 = vmatpush1.msra.mxu0 0.0
      %511 = vmatprep.subr.mxu0 0.0
      %512 = vmatpush1.msra.mxu0 0.0
      %513 = vmatprep.subr.mxu0 0.0
      %514 = vmatpush1.msra.mxu0 0.0
      %515 = vmatprep.subr.mxu0 0.0
      %516 = vmatpush1.msra.mxu0 0.0
      %517 = vmatprep.subr.mxu0 0.0
      %518 = vmatpush1.msra.mxu0 0.0
      %519 = vmatprep.subr.mxu0 0.0
      %520 = vmatpush1.msra.mxu0 0.0
      %521 = vmatprep.subr.mxu0 0.0
      %522 = vmatpush1.msra.mxu0 0.0
      %523 = vmatprep.subr.mxu0 0.0
      %524 = vmatpush1.msra.mxu0 0.0
      %525 = vmatprep.subr.mxu0 0.0
      %526 = vmatpush1.msra.mxu0 0.0
      %527 = vmatprep.subr.mxu0 0.0
      %528 = vmatpush1.msra.mxu0 0.0
      %529 = vmatprep.subr.mxu0 0.0
      %530 = vmatpush1.msra.mxu0 0.0
      %531 = vmatprep.subr.mxu0 0.0
      %532 = vmatpush1.msra.mxu0 0.0
      %533 = vmatprep.subr.mxu0 0.0
      %534 = vmatpush1.msra.mxu0 0.0
      %535 = vmatprep.mubr.f32.mxu0 0.0
      %536 = vmatmul.mubr.f32.gmra.mrb[0].mxu0 %v424
      %v537 = vpop.f32.mrb[0].mxu0
      %v538 = vadd.f32 %v422, %v537
      %v539 = vpop.f32.mrb[0].mxu0
      %540 = vmatprep.mubr.f32.mxu0 0.0
      %541 = vmatmul.mubr.f32.gmra.mrb[0].mxu0 %v427
      %v542 = vpop.f32.mrb[0].mxu0
      %v543 = vadd.f32 %v422, %v542
      %v544 = vpop.f32.mrb[0].mxu0
      %545 = vmatprep.mubr.f32.mxu0 0.0
      %546 = vmatmul.mubr.f32.gmra.mrb[0].mxu0 %v430
      %v547 = vpop.f32.mrb[0].mxu0
      %v548 = vadd.f32 %v422, %v547
      %v549 = vpop.f32.mrb[0].mxu0
      %550 = vmatprep.mubr.f32.mxu0 0.0
      %551 = vmatmul.mubr.f32.gmra.mrb[0].mxu0 %v433
      %v552 = vpop.f32.mrb[0].mxu0
      %v553 = vadd.f32 %v422, %v552
      %v554 = vpop.f32.mrb[0].mxu0
      %555 = vmatprep.mubr.f32.mxu0 0.0
      %556 = vmatmul.mubr.f32.gmra.mrb[0].mxu0 %v436
      %v557 = vpop.f32.mrb[0].mxu0
      %v558 = vadd.f32 %v422, %v557
      %v559 = vpop.f32.mrb[0].mxu0
      %560 = vmatprep.mubr.f32.mxu0 0.0
      %561 = vmatmul.mubr.f32.gmra.mrb[0].mxu0 %v439
      %v562 = vpop.f32.mrb[0].mxu0
      %v563 = vadd.f32 %v422, %v562
      %v564 = vpop.f32.mrb[0].mxu0
      %565 = vmatprep.mubr.f32.mxu0 0.0
      %566 = vmatmul.mubr.f32.gmra.mrb[0].mxu0 %v442
      %v567 = vpop.f32.mrb[0].mxu0
      %v568 = vadd.f32 %v422, %v567
      %v569 = vpop.f32.mrb[0].mxu0
      %570 = vmatprep.mubr.f32.mxu0 0.0
      %571 = vmatmul.mubr.f32.gmra.mrb[0].mxu0 %v445
      %v572 = vpop.f32.mrb[0].mxu0
      %v573 = vadd.f32 %v422, %v572
      %v574 = vpop.f32.mrb[0].mxu0
      %575 = vmatprep.mubr.f32.mxu0 0.0
      %576 = vmatmul.mubr.f32.gmra.mrb[0].mxu0 %v448
      %v577 = vpop.f32.mrb[0].mxu0
      %v578 = vadd.f32 %v422, %v577
      %v579 = vpop.f32.mrb[0].mxu0
      %580 = vmatprep.mubr.f32.mxu0 0.0
      %581 = vmatmul.mubr.f32.gmra.mrb[0].mxu0 %v451
      %v582 = vpop.f32.mrb[0].mxu0
      %v583 = vadd.f32 %v422, %v582
      %v584 = vpop.f32.mrb[0].mxu0
      %585 = vmatprep.mubr.f32.mxu0 0.0
      %586 = vmatmul.mubr.f32.gmra.mrb[0].mxu0 %v454
      %v587 = vpop.f32.mrb[0].mxu0
      %v588 = vadd.f32 %v422, %v587
      %v589 = vpop.f32.mrb[0].mxu0
      %590 = vmatprep.mubr.f32.mxu0 0.0
      %591 = vmatmul.mubr.f32.gmra.mrb[0].mxu0 %v457
      %v592 = vpop.f32.mrb[0].mxu0
      %v593 = vadd.f32 %v422, %v592
      %v594 = vpop.f32.mrb[0].mxu0
      %595 = vmatprep.mubr.f32.mxu0 0.0
      %596 = vmatmul.mubr.f32.gmra.mrb[0].mxu0 %v460
      %v597 = vpop.f32.mrb[0].mxu0
      %v598 = vadd.f32 %v422, %v597
      %v599 = vpop.f32.mrb[0].mxu0
      %600 = vmatprep.mubr.f32.mxu0 0.0
      %601 = vmatmul.mubr.f32.gmra.mrb[0].mxu0 %v463
      %v602 = vpop.f32.mrb[0].mxu0
      %v603 = vadd.f32 %v422, %v602
      %v604 = vpop.f32.mrb[0].mxu0
      %605 = vmatprep.mubr.f32.mxu0 0.0
      %606 = vmatmul.mubr.f32.gmra.mrb[0].mxu0 %v466
      %v607 = vpop.f32.mrb[0].mxu0
      %v608 = vadd.f32 %v422, %v607
      %v609 = vpop.f32.mrb[0].mxu0
      %610 = vmatprep.mubr.f32.mxu0 0.0
      %611 = vmatmul.mubr.f32.gmra.mrb[0].mxu0 %v469
      %v612 = vpop.f32.mrb[0].mxu0
      %v613 = vadd.f32 %v422, %v612
      %v614 = vpop.f32.mrb[0].mxu0
      %615 = vdwg.mxu0
      %vm616 = vcmp.gt.f32.partialorder %v538, 0.0
      %vm617 = vcmp.gt.f32.partialorder %v543, 0.0
      %vm618 = vcmp.gt.f32.partialorder %v548, 0.0
      %vm619 = vcmp.gt.f32.partialorder %v553, 0.0
      %vm620 = vcmp.gt.f32.partialorder %v558, 0.0
      %vm621 = vcmp.gt.f32.partialorder %v563, 0.0
      %vm622 = vcmp.gt.f32.partialorder %v568, 0.0
      %vm623 = vcmp.gt.f32.partialorder %v573, 0.0
      %vm624 = vcmp.gt.f32.partialorder %v578, 0.0
      %vm625 = vcmp.gt.f32.partialorder %v583, 0.0
      %vm626 = vcmp.gt.f32.partialorder %v588, 0.0
      %vm627 = vcmp.gt.f32.partialorder %v593, 0.0
      %vm628 = vcmp.gt.f32.partialorder %v598, 0.0
      %vm629 = vcmp.gt.f32.partialorder %v603, 0.0
      %vm630 = vcmp.gt.f32.partialorder %v608, 0.0
      %vm631 = vcmp.gt.f32.partialorder %v613, 0.0
      %v632 = vmul.f32 %v538, 0.01
      %v633 = vmul.f32 %v543, 0.01
      %v634 = vmul.f32 %v548, 0.01
      %v635 = vmul.f32 %v553, 0.01
      %v636 = vmul.f32 %v558, 0.01
      %v637 = vmul.f32 %v563, 0.01
      %v638 = vmul.f32 %v568, 0.01
      %v639 = vmul.f32 %v573, 0.01
      %v640 = vmul.f32 %v578, 0.01
      %v641 = vmul.f32 %v583, 0.01
      %v642 = vmul.f32 %v588, 0.01
      %v643 = vmul.f32 %v593, 0.01
      %v644 = vmul.f32 %v598, 0.01
      %v645 = vmul.f32 %v603, 0.01
      %v646 = vmul.f32 %v608, 0.01
      %v647 = vmul.f32 %v613, 0.01
      %v648 = vsel %vm616, %v538, %v632
      %v649 = vsel %vm617, %v543, %v633
      %v650 = vsel %vm618, %v548, %v634
      %v651 = vsel %vm619, %v553, %v635
      %v652 = vsel %vm620, %v558, %v636
      %v653 = vsel %vm621, %v563, %v637
      %v654 = vsel %vm622, %v568, %v638
      %v655 = vsel %vm623, %v573, %v639
      %v656 = vsel %vm624, %v578, %v640
      %v657 = vsel %vm625, %v583, %v641
      %v658 = vsel %vm626, %v588, %v642
      %v659 = vsel %vm627, %v593, %v643
      %v660 = vsel %vm628, %v598, %v644
      %v661 = vsel %vm629, %v603, %v645
      %v662 = vsel %vm630, %v608, %v646
      %v663 = vsel %vm631, %v613, %v647
      %v664 = vld [vmem:[%s1 + $0x40] sm:$0xff]
      %v665 = vld [vmem:[%s1 + $0x48] sm:$0xff]
      %v666 = vld [vmem:[%s1 + $0x50] sm:$0xff]
      %v667 = vld [vmem:[%s1 + $0x58] sm:$0xff]
      %v668 = vld [vmem:[%s1 + $0xd2] sm:$0x1]
      %v669 = vlaneseq
      %v670 = vshrl.u32 %v669, 7
      %v671 = vsub.s32 0, %v670
      %v672 = vrot.slane %v668, %v671
      %v674 = vsel %vm172, %v648, 0
      %v677 = vsel %vm172, %v649, 0
      %v680 = vsel %vm172, %v650, 0
      %v683 = vsel %vm172, %v651, 0
      %v686 = vsel %vm172, %v652, 0
      %v689 = vsel %vm172, %v653, 0
      %v692 = vsel %vm172, %v654, 0
      %v695 = vsel %vm172, %v655, 0
      %v698 = vsel %vm172, %v656, 0
      %v701 = vsel %vm172, %v657, 0
      %v704 = vsel %vm172, %v658, 0
      %v707 = vsel %vm172, %v659, 0
      %v710 = vsel %vm172, %v660, 0
      %v713 = vsel %vm172, %v661, 0
      %v716 = vsel %vm172, %v662, 0
      %v719 = vsel %vm172, %v663, 0
      %721 = vmatprep.subr.mxu0 0.0
      %722 = vmatpush1.msra.mxu0 %v664
      %723 = vmatprep.subr.mxu0 0.0
      %724 = vmatpush1.msra.mxu0 %v665
      %725 = vmatprep.subr.mxu0 0.0
      %726 = vmatpush1.msra.mxu0 %v666
      %727 = vmatprep.subr.mxu0 0.0
      %728 = vmatpush1.msra.mxu0 %v667
      %729 = vmatprep.subr.mxu0 0.0
      %730 = vmatpush1.msra.mxu0 0.0
      %731 = vmatprep.subr.mxu0 0.0
      %732 = vmatpush1.msra.mxu0 0.0
      %733 = vmatprep.subr.mxu0 0.0
      %734 = vmatpush1.msra.mxu0 0.0
      %735 = vmatprep.subr.mxu0 0.0
      %736 = vmatpush1.msra.mxu0 0.0
      %737 = vmatprep.subr.mxu0 0.0
      %738 = vmatpush1.msra.mxu0 0.0
      %739 = vmatprep.subr.mxu0 0.0
      %740 = vmatpush1.msra.mxu0 0.0
      %741 = vmatprep.subr.mxu0 0.0
      %742 = vmatpush1.msra.mxu0 0.0
      %743 = vmatprep.subr.mxu0 0.0
      %744 = vmatpush1.msra.mxu0 0.0
      %745 = vmatprep.subr.mxu0 0.0
      %746 = vmatpush1.msra.mxu0 0.0
      %747 = vmatprep.subr.mxu0 0.0
      %748 = vmatpush1.msra.mxu0 0.0
      %749 = vmatprep.subr.mxu0 0.0
      %750 = vmatpush1.msra.mxu0 0.0
      %751 = vmatprep.subr.mxu0 0.0
      %752 = vmatpush1.msra.mxu0 0.0
      %753 = vmatprep.subr.mxu0 0.0
      %754 = vmatpush1.msra.mxu0 0.0
      %755 = vmatprep.subr.mxu0 0.0
      %756 = vmatpush1.msra.mxu0 0.0
      %757 = vmatprep.subr.mxu0 0.0
      %758 = vmatpush1.msra.mxu0 0.0
      %759 = vmatprep.subr.mxu0 0.0
      %760 = vmatpush1.msra.mxu0 0.0
      %761 = vmatprep.subr.mxu0 0.0
      %762 = vmatpush1.msra.mxu0 0.0
      %763 = vmatprep.subr.mxu0 0.0
      %764 = vmatpush1.msra.mxu0 0.0
      %765 = vmatprep.subr.mxu0 0.0
      %766 = vmatpush1.msra.mxu0 0.0
      %767 = vmatprep.subr.mxu0 0.0
      %768 = vmatpush1.msra.mxu0 0.0
      %769 = vmatprep.subr.mxu0 0.0
      %770 = vmatpush1.msra.mxu0 0.0
      %771 = vmatprep.subr.mxu0 0.0
      %772 = vmatpush1.msra.mxu0 0.0
      %773 = vmatprep.subr.mxu0 0.0
      %774 = vmatpush1.msra.mxu0 0.0
      %775 = vmatprep.subr.mxu0 0.0
      %776 = vmatpush1.msra.mxu0 0.0
      %777 = vmatprep.subr.mxu0 0.0
      %778 = vmatpush1.msra.mxu0 0.0
      %779 = vmatprep.subr.mxu0 0.0
      %780 = vmatpush1.msra.mxu0 0.0
      %781 = vmatprep.subr.mxu0 0.0
      %782 = vmatpush1.msra.mxu0 0.0
      %783 = vmatprep.subr.mxu0 0.0
      %784 = vmatpush1.msra.mxu0 0.0
      %785 = vmatprep.mubr.f32.mxu0 0.0
      %786 = vmatmul.mubr.f32.gmra.mrb[0].mxu0 %v674
      %v787 = vpop.f32.mrb[0].mxu0
      %v788 = vadd.f32 %v672, %v787
      %v789 = vpop.f32.mrb[0].mxu0
      %790 = vmatprep.mubr.f32.mxu0 0.0
      %791 = vmatmul.mubr.f32.gmra.mrb[0].mxu0 %v677
      %v792 = vpop.f32.mrb[0].mxu0
      %v793 = vadd.f32 %v672, %v792
      %v794 = vpop.f32.mrb[0].mxu0
      %795 = vmatprep.mubr.f32.mxu0 0.0
      %796 = vmatmul.mubr.f32.gmra.mrb[0].mxu0 %v680
      %v797 = vpop.f32.mrb[0].mxu0
      %v798 = vadd.f32 %v672, %v797
      %v799 = vpop.f32.mrb[0].mxu0
      %800 = vmatprep.mubr.f32.mxu0 0.0
      %801 = vmatmul.mubr.f32.gmra.mrb[0].mxu0 %v683
      %v802 = vpop.f32.mrb[0].mxu0
      %v803 = vadd.f32 %v672, %v802
      %v804 = vpop.f32.mrb[0].mxu0
      %805 = vmatprep.mubr.f32.mxu0 0.0
      %806 = vmatmul.mubr.f32.gmra.mrb[0].mxu0 %v686
      %v807 = vpop.f32.mrb[0].mxu0
      %v808 = vadd.f32 %v672, %v807
      %v809 = vpop.f32.mrb[0].mxu0
      %810 = vmatprep.mubr.f32.mxu0 0.0
      %811 = vmatmul.mubr.f32.gmra.mrb[0].mxu0 %v689
      %v812 = vpop.f32.mrb[0].mxu0
      %v813 = vadd.f32 %v672, %v812
      %v814 = vpop.f32.mrb[0].mxu0
      %815 = vmatprep.mubr.f32.mxu0 0.0
      %816 = vmatmul.mubr.f32.gmra.mrb[0].mxu0 %v692
      %v817 = vpop.f32.mrb[0].mxu0
      %v818 = vadd.f32 %v672, %v817
      %v819 = vpop.f32.mrb[0].mxu0
      %820 = vmatprep.mubr.f32.mxu0 0.0
      %821 = vmatmul.mubr.f32.gmra.mrb[0].mxu0 %v695
      %v822 = vpop.f32.mrb[0].mxu0
      %v823 = vadd.f32 %v672, %v822
      %v824 = vpop.f32.mrb[0].mxu0
      %825 = vmatprep.mubr.f32.mxu0 0.0
      %826 = vmatmul.mubr.f32.gmra.mrb[0].mxu0 %v698
      %v827 = vpop.f32.mrb[0].mxu0
      %v828 = vadd.f32 %v672, %v827
      %v829 = vpop.f32.mrb[0].mxu0
      %830 = vmatprep.mubr.f32.mxu0 0.0
      %831 = vmatmul.mubr.f32.gmra.mrb[0].mxu0 %v701
      %v832 = vpop.f32.mrb[0].mxu0
      %v833 = vadd.f32 %v672, %v832
      %v834 = vpop.f32.mrb[0].mxu0
      %835 = vmatprep.mubr.f32.mxu0 0.0
      %836 = vmatmul.mubr.f32.gmra.mrb[0].mxu0 %v704
      %v837 = vpop.f32.mrb[0].mxu0
      %v838 = vadd.f32 %v672, %v837
      %v839 = vpop.f32.mrb[0].mxu0
      %840 = vmatprep.mubr.f32.mxu0 0.0
      %841 = vmatmul.mubr.f32.gmra.mrb[0].mxu0 %v707
      %v842 = vpop.f32.mrb[0].mxu0
      %v843 = vadd.f32 %v672, %v842
      %v844 = vpop.f32.mrb[0].mxu0
      %845 = vmatprep.mubr.f32.mxu0 0.0
      %846 = vmatmul.mubr.f32.gmra.mrb[0].mxu0 %v710
      %v847 = vpop.f32.mrb[0].mxu0
      %v848 = vadd.f32 %v672, %v847
      %v849 = vpop.f32.mrb[0].mxu0
      %850 = vmatprep.mubr.f32.mxu0 0.0
      %851 = vmatmul.mubr.f32.gmra.mrb[0].mxu0 %v713
      %v852 = vpop.f32.mrb[0].mxu0
      %v853 = vadd.f32 %v672, %v852
      %v854 = vpop.f32.mrb[0].mxu0
      %855 = vmatprep.mubr.f32.mxu0 0.0
      %856 = vmatmul.mubr.f32.gmra.mrb[0].mxu0 %v716
      %v857 = vpop.f32.mrb[0].mxu0
      %v858 = vadd.f32 %v672, %v857
      %v859 = vpop.f32.mrb[0].mxu0
      %860 = vmatprep.mubr.f32.mxu0 0.0
      %861 = vmatmul.mubr.f32.gmra.mrb[0].mxu0 %v719
      %v862 = vpop.f32.mrb[0].mxu0
      %v863 = vadd.f32 %v672, %v862
      %v864 = vpop.f32.mrb[0].mxu0
      %865 = vdwg.mxu0
      %vm866 = vcmask 285952
      %v867 = vsel %vm866, %v788, -inf
      %868 = vmax.xlane.f32.xlu0 %v867
      %v869 = vpop.xlane.xlu0 %868
      %v870 = vsel %vm866, %v793, -inf
      %871 = vmax.xlane.f32.xlu0 %v870
      %v872 = vpop.xlane.xlu0 %871
      %v873 = vsel %vm866, %v798, -inf
      %874 = vmax.xlane.f32.xlu0 %v873
      %v875 = vpop.xlane.xlu0 %874
      %v876 = vsel %vm866, %v803, -inf
      %877 = vmax.xlane.f32.xlu0 %v876
      %v878 = vpop.xlane.xlu0 %877
      %v879 = vsel %vm866, %v808, -inf
      %880 = vmax.xlane.f32.xlu0 %v879
      %v881 = vpop.xlane.xlu0 %880
      %v882 = vsel %vm866, %v813, -inf
      %883 = vmax.xlane.f32.xlu0 %v882
      %v884 = vpop.xlane.xlu0 %883
      %v885 = vsel %vm866, %v818, -inf
      %886 = vmax.xlane.f32.xlu0 %v885
      %v887 = vpop.xlane.xlu0 %886
      %v888 = vsel %vm866, %v823, -inf
      %889 = vmax.xlane.f32.xlu0 %v888
      %v890 = vpop.xlane.xlu0 %889
      %v891 = vsel %vm866, %v828, -inf
      %892 = vmax.xlane.f32.xlu0 %v891
      %v893 = vpop.xlane.xlu0 %892
      %v894 = vsel %vm866, %v833, -inf
      %895 = vmax.xlane.f32.xlu0 %v894
      %v896 = vpop.xlane.xlu0 %895
      %v897 = vsel %vm866, %v838, -inf
      %898 = vmax.xlane.f32.xlu0 %v897
      %v899 = vpop.xlane.xlu0 %898
      %v900 = vsel %vm866, %v843, -inf
      %901 = vmax.xlane.f32.xlu0 %v900
      %v902 = vpop.xlane.xlu0 %901
      %v903 = vsel %vm866, %v848, -inf
      %904 = vmax.xlane.f32.xlu0 %v903
      %v905 = vpop.xlane.xlu0 %904
      %v906 = vsel %vm866, %v853, -inf
      %907 = vmax.xlane.f32.xlu0 %v906
      %v908 = vpop.xlane.xlu0 %907
      %v909 = vsel %vm866, %v858, -inf
      %910 = vmax.xlane.f32.xlu0 %v909
      %v911 = vpop.xlane.xlu0 %910
      %v912 = vsel %vm866, %v863, -inf
      %913 = vmax.xlane.f32.xlu0 %v912
      %v914 = vpop.xlane.xlu0 %913
      %v915 = vsub.f32 %v788, %v869
      %v916 = vsub.f32 %v793, %v872
      %v917 = vsub.f32 %v798, %v875
      %v918 = vsub.f32 %v803, %v878
      %v919 = vsub.f32 %v808, %v881
      %v920 = vsub.f32 %v813, %v884
      %v921 = vsub.f32 %v818, %v887
      %v922 = vsub.f32 %v823, %v890
      %v923 = vsub.f32 %v828, %v893
      %v924 = vsub.f32 %v833, %v896
      %v925 = vsub.f32 %v838, %v899
      %v926 = vsub.f32 %v843, %v902
      %v927 = vsub.f32 %v848, %v905
      %v928 = vsub.f32 %v853, %v908
      %v929 = vsub.f32 %v858, %v911
      %v930 = vsub.f32 %v863, %v914
      %v931 = vmul.f32 %v915, 1.442695
      %v932 = vpow.pop %v931
      %v933 = vmul.f32 %v916, 1.442695
      %v934 = vpow.pop %v933
      %v935 = vmul.f32 %v917, 1.442695
      %v936 = vpow.pop %v935
      %v937 = vmul.f32 %v918, 1.442695
      %v938 = vpow.pop %v937
      %v939 = vmul.f32 %v919, 1.442695
      %v940 = vpow.pop %v939
      %v941 = vmul.f32 %v920, 1.442695
      %v942 = vpow.pop %v941
      %v943 = vmul.f32 %v921, 1.442695
      %v944 = vpow.pop %v943
      %v945 = vmul.f32 %v922, 1.442695
      %v946 = vpow.pop %v945
      %v947 = vmul.f32 %v923, 1.442695
      %v948 = vpow.pop %v947
      %v949 = vmul.f32 %v924, 1.442695
      %v950 = vpow.pop %v949
      %v951 = vmul.f32 %v925, 1.442695
      %v952 = vpow.pop %v951
      %v953 = vmul.f32 %v926, 1.442695
      %v954 = vpow.pop %v953
      %v955 = vmul.f32 %v927, 1.442695
      %v956 = vpow.pop %v955
      %v957 = vmul.f32 %v928, 1.442695
      %v958 = vpow.pop %v957
      %v959 = vmul.f32 %v929, 1.442695
      %v960 = vpow.pop %v959
      %v961 = vmul.f32 %v930, 1.442695
      %v962 = vpow.pop %v961
      %979 = vrot.lane.b32.xlu0 %v932, 96
      %v980 = vpop.permute.xlu0 %979
      %981 = vrot.lane.b32.xlu0 %v934, 96
      %v982 = vpop.permute.xlu0 %981
      %983 = vrot.lane.b32.xlu0 %v936, 96
      %v984 = vpop.permute.xlu0 %983
      %985 = vrot.lane.b32.xlu0 %v938, 96
      %v986 = vpop.permute.xlu0 %985
      %987 = vrot.lane.b32.xlu0 %v940, 96
      %v988 = vpop.permute.xlu0 %987
      %989 = vrot.lane.b32.xlu0 %v942, 96
      %v990 = vpop.permute.xlu0 %989
      %991 = vrot.lane.b32.xlu0 %v944, 96
      %v992 = vpop.permute.xlu0 %991
      %993 = vrot.lane.b32.xlu0 %v946, 96
      %v994 = vpop.permute.xlu0 %993
      %995 = vrot.lane.b32.xlu0 %v948, 96
      %v996 = vpop.permute.xlu0 %995
      %997 = vrot.lane.b32.xlu0 %v950, 96
      %v998 = vpop.permute.xlu0 %997
      %999 = vrot.lane.b32.xlu0 %v952, 96
      %v1000 = vpop.permute.xlu0 %999
      %1001 = vrot.lane.b32.xlu0 %v954, 96
      %v1002 = vpop.permute.xlu0 %1001
      %1003 = vrot.lane.b32.xlu0 %v956, 96
      %v1004 = vpop.permute.xlu0 %1003
      %1005 = vrot.lane.b32.xlu0 %v958, 96
      %v1006 = vpop.permute.xlu0 %1005
      %1007 = vrot.lane.b32.xlu0 %v960, 96
      %v1008 = vpop.permute.xlu0 %1007
      %1009 = vrot.lane.b32.xlu0 %v962, 96
      %v1010 = vpop.permute.xlu0 %1009
      %vm1027 = vcmask 23552
      %v1028 = vsel %vm1027, %v980, 0.0
      %1029 = vadd.xlane.f32.xlu0 %v1028
      %v1030 = vpop.xlane.xlu0 %1029
      %v1031 = vsel %vm1027, %v982, 0.0
      %1032 = vadd.xlane.f32.xlu0 %v1031
      %v1033 = vpop.xlane.xlu0 %1032
      %v1034 = vsel %vm1027, %v984, 0.0
      %1035 = vadd.xlane.f32.xlu0 %v1034
      %v1036 = vpop.xlane.xlu0 %1035
      %v1037 = vsel %vm1027, %v986, 0.0
      %1038 = vadd.xlane.f32.xlu0 %v1037
      %v1039 = vpop.xlane.xlu0 %1038
      %v1040 = vsel %vm1027, %v988, 0.0
      %1041 = vadd.xlane.f32.xlu0 %v1040
      %v1042 = vpop.xlane.xlu0 %1041
      %v1043 = vsel %vm1027, %v990, 0.0
      %1044 = vadd.xlane.f32.xlu0 %v1043
      %v1045 = vpop.xlane.xlu0 %1044
      %v1046 = vsel %vm1027, %v992, 0.0
      %1047 = vadd.xlane.f32.xlu0 %v1046
      %v1048 = vpop.xlane.xlu0 %1047
      %v1049 = vsel %vm1027, %v994, 0.0
      %1050 = vadd.xlane.f32.xlu0 %v1049
      %v1051 = vpop.xlane.xlu0 %1050
      %v1052 = vsel %vm1027, %v996, 0.0
      %1053 = vadd.xlane.f32.xlu0 %v1052
      %v1054 = vpop.xlane.xlu0 %1053
      %v1055 = vsel %vm1027, %v998, 0.0
      %1056 = vadd.xlane.f32.xlu0 %v1055
      %v1057 = vpop.xlane.xlu0 %1056
      %v1058 = vsel %vm1027, %v1000, 0.0
      %1059 = vadd.xlane.f32.xlu0 %v1058
      %v1060 = vpop.xlane.xlu0 %1059
      %v1061 = vsel %vm1027, %v1002, 0.0
      %1062 = vadd.xlane.f32.xlu0 %v1061
      %v1063 = vpop.xlane.xlu0 %1062
      %v1064 = vsel %vm1027, %v1004, 0.0
      %1065 = vadd.xlane.f32.xlu0 %v1064
      %v1066 = vpop.xlane.xlu0 %1065
      %v1067 = vsel %vm1027, %v1006, 0.0
      %1068 = vadd.xlane.f32.xlu0 %v1067
      %v1069 = vpop.xlane.xlu0 %1068
      %v1070 = vsel %vm1027, %v1008, 0.0
      %1071 = vadd.xlane.f32.xlu0 %v1070
      %v1072 = vpop.xlane.xlu0 %1071
      %v1073 = vsel %vm1027, %v1010, 0.0
      %1074 = vadd.xlane.f32.xlu0 %v1073
      %v1075 = vpop.xlane.xlu0 %1074
      %v1076 = vrcp.pop %v1030
      %v1077 = vrcp.pop %v1033
      %v1078 = vrcp.pop %v1036
      %v1079 = vrcp.pop %v1039
      %v1080 = vrcp.pop %v1042
      %v1081 = vrcp.pop %v1045
      %v1082 = vrcp.pop %v1048
      %v1083 = vrcp.pop %v1051
      %v1084 = vrcp.pop %v1054
      %v1085 = vrcp.pop %v1057
      %v1086 = vrcp.pop %v1060
      %v1087 = vrcp.pop %v1063
      %v1088 = vrcp.pop %v1066
      %v1089 = vrcp.pop %v1069
      %v1090 = vrcp.pop %v1072
      %v1091 = vrcp.pop %v1075
      %v1092 = vmul.f32 %v932, %v1076
      %v1093 = vmul.f32 %v934, %v1077
      %v1094 = vmul.f32 %v936, %v1078
      %v1095 = vmul.f32 %v938, %v1079
      %v1096 = vmul.f32 %v940, %v1080
      %v1097 = vmul.f32 %v942, %v1081
      %v1098 = vmul.f32 %v944, %v1082
      %v1099 = vmul.f32 %v946, %v1083
      %v1100 = vmul.f32 %v948, %v1084
      %v1101 = vmul.f32 %v950, %v1085
      %v1102 = vmul.f32 %v952, %v1086
      %v1103 = vmul.f32 %v954, %v1087
      %v1104 = vmul.f32 %v956, %v1088
      %v1105 = vmul.f32 %v958, %v1089
      %v1106 = vmul.f32 %v960, %v1090
      %v1107 = vmul.f32 %v962, %v1091
      %v1108 = vld [vmem:[%s1 + $0x60] sm:$0xff]
      %v1109 = vld [vmem:[%s1 + $0x68] sm:$0xff]
      %v1110 = vld [vmem:[%s1 + $0xd3] sm:$0x1]
      %v1111 = vlaneseq
      %v1112 = vshrl.u32 %v1111, 7
      %v1113 = vsub.s32 0, %v1112
      %v1114 = vrot.slane %v1110, %v1113
      %vm1115 = vcmask 130048
      %v1117 = vsel %vm1115, %v788, 0
      %v1120 = vsel %vm1115, %v793, 0
      %v1123 = vsel %vm1115, %v798, 0
      %v1126 = vsel %vm1115, %v803, 0
      %v1129 = vsel %vm1115, %v808, 0
      %v1132 = vsel %vm1115, %v813, 0
      %v1135 = vsel %vm1115, %v818, 0
      %v1138 = vsel %vm1115, %v823, 0
      %v1141 = vsel %vm1115, %v828, 0
      %v1144 = vsel %vm1115, %v833, 0
      %v1147 = vsel %vm1115, %v838, 0
      %v1150 = vsel %vm1115, %v843, 0
      %v1153 = vsel %vm1115, %v848, 0
      %v1156 = vsel %vm1115, %v853, 0
      %v1159 = vsel %vm1115, %v858, 0
      %v1162 = vsel %vm1115, %v863, 0
      %1164 = vmatprep.subr.mxu0 0.0
      %1165 = vmatpush1.msra.mxu0 %v1108
      %1166 = vmatprep.subr.mxu0 0.0
      %1167 = vmatpush1.msra.mxu0 %v1109
      %1168 = vmatprep.subr.mxu0 0.0
      %1169 = vmatpush1.msra.mxu0 0.0
      %1170 = vmatprep.subr.mxu0 0.0
      %1171 = vmatpush1.msra.mxu0 0.0
      %1172 = vmatprep.subr.mxu0 0.0
      %1173 = vmatpush1.msra.mxu0 0.0
      %1174 = vmatprep.subr.mxu0 0.0
      %1175 = vmatpush1.msra.mxu0 0.0
      %1176 = vmatprep.subr.mxu0 0.0
      %1177 = vmatpush1.msra.mxu0 0.0
      %1178 = vmatprep.subr.mxu0 0.0
      %1179 = vmatpush1.msra.mxu0 0.0
      %1180 = vmatprep.subr.mxu0 0.0
      %1181 = vmatpush1.msra.mxu0 0.0
      %1182 = vmatprep.subr.mxu0 0.0
      %1183 = vmatpush1.msra.mxu0 0.0
      %1184 = vmatprep.subr.mxu0 0.0
      %1185 = vmatpush1.msra.mxu0 0.0
      %1186 = vmatprep.subr.mxu0 0.0
      %1187 = vmatpush1.msra.mxu0 0.0
      %1188 = vmatprep.subr.mxu0 0.0
      %1189 = vmatpush1.msra.mxu0 0.0
      %1190 = vmatprep.subr.mxu0 0.0
      %1191 = vmatpush1.msra.mxu0 0.0
      %1192 = vmatprep.subr.mxu0 0.0
      %1193 = vmatpush1.msra.mxu0 0.0
      %1194 = vmatprep.subr.mxu0 0.0
      %1195 = vmatpush1.msra.mxu0 0.0
      %1196 = vmatprep.subr.mxu0 0.0
      %1197 = vmatpush1.msra.mxu0 0.0
      %1198 = vmatprep.subr.mxu0 0.0
      %1199 = vmatpush1.msra.mxu0 0.0
      %1200 = vmatprep.subr.mxu0 0.0
      %1201 = vmatpush1.msra.mxu0 0.0
      %1202 = vmatprep.subr.mxu0 0.0
      %1203 = vmatpush1.msra.mxu0 0.0
      %1204 = vmatprep.subr.mxu0 0.0
      %1205 = vmatpush1.msra.mxu0 0.0
      %1206 = vmatprep.subr.mxu0 0.0
      %1207 = vmatpush1.msra.mxu0 0.0
      %1208 = vmatprep.subr.mxu0 0.0
      %1209 = vmatpush1.msra.mxu0 0.0
      %1210 = vmatprep.subr.mxu0 0.0
      %1211 = vmatpush1.msra.mxu0 0.0
      %1212 = vmatprep.subr.mxu0 0.0
      %1213 = vmatpush1.msra.mxu0 0.0
      %1214 = vmatprep.subr.mxu0 0.0
      %1215 = vmatpush1.msra.mxu0 0.0
      %1216 = vmatprep.subr.mxu0 0.0
      %1217 = vmatpush1.msra.mxu0 0.0
      %1218 = vmatprep.subr.mxu0 0.0
      %1219 = vmatpush1.msra.mxu0 0.0
      %1220 = vmatprep.subr.mxu0 0.0
      %1221 = vmatpush1.msra.mxu0 0.0
      %1222 = vmatprep.subr.mxu0 0.0
      %1223 = vmatpush1.msra.mxu0 0.0
      %1224 = vmatprep.subr.mxu0 0.0
      %1225 = vmatpush1.msra.mxu0 0.0
      %1226 = vmatprep.subr.mxu0 0.0
      %1227 = vmatpush1.msra.mxu0 0.0
      %1228 = vmatprep.mubr.f32.mxu0 0.0
      %1229 = vmatmul.mubr.f32.gmra.mrb[0].mxu0 %v1117
      %v1230 = vpop.f32.mrb[0].mxu0
      %v1231 = vadd.f32 %v1114, %v1230
      %v1232 = vpop.f32.mrb[0].mxu0
      %1233 = vmatprep.mubr.f32.mxu0 0.0
      %1234 = vmatmul.mubr.f32.gmra.mrb[0].mxu0 %v1120
      %v1235 = vpop.f32.mrb[0].mxu0
      %v1236 = vadd.f32 %v1114, %v1235
      %v1237 = vpop.f32.mrb[0].mxu0
      %1238 = vmatprep.mubr.f32.mxu0 0.0
      %1239 = vmatmul.mubr.f32.gmra.mrb[0].mxu0 %v1123
      %v1240 = vpop.f32.mrb[0].mxu0
      %v1241 = vadd.f32 %v1114, %v1240
      %v1242 = vpop.f32.mrb[0].mxu0
      %1243 = vmatprep.mubr.f32.mxu0 0.0
      %1244 = vmatmul.mubr.f32.gmra.mrb[0].mxu0 %v1126
      %v1245 = vpop.f32.mrb[0].mxu0
      %v1246 = vadd.f32 %v1114, %v1245
      %v1247 = vpop.f32.mrb[0].mxu0
      %1248 = vmatprep.mubr.f32.mxu0 0.0
      %1249 = vmatmul.mubr.f32.gmra.mrb[0].mxu0 %v1129
      %v1250 = vpop.f32.mrb[0].mxu0
      %v1251 = vadd.f32 %v1114, %v1250
      %v1252 = vpop.f32.mrb[0].mxu0
      %1253 = vmatprep.mubr.f32.mxu0 0.0
      %1254 = vmatmul.mubr.f32.gmra.mrb[0].mxu0 %v1132
      %v1255 = vpop.f32.mrb[0].mxu0
      %v1256 = vadd.f32 %v1114, %v1255
      %v1257 = vpop.f32.mrb[0].mxu0
      %1258 = vmatprep.mubr.f32.mxu0 0.0
      %1259 = vmatmul.mubr.f32.gmra.mrb[0].mxu0 %v1135
      %v1260 = vpop.f32.mrb[0].mxu0
      %v1261 = vadd.f32 %v1114, %v1260
      %v1262 = vpop.f32.mrb[0].mxu0
      %1263 = vmatprep.mubr.f32.mxu0 0.0
      %1264 = vmatmul.mubr.f32.gmra.mrb[0].mxu0 %v1138
      %v1265 = vpop.f32.mrb[0].mxu0
      %v1266 = vadd.f32 %v1114, %v1265
      %v1267 = vpop.f32.mrb[0].mxu0
      %1268 = vmatprep.mubr.f32.mxu0 0.0
      %1269 = vmatmul.mubr.f32.gmra.mrb[0].mxu0 %v1141
      %v1270 = vpop.f32.mrb[0].mxu0
      %v1271 = vadd.f32 %v1114, %v1270
      %v1272 = vpop.f32.mrb[0].mxu0
      %1273 = vmatprep.mubr.f32.mxu0 0.0
      %1274 = vmatmul.mubr.f32.gmra.mrb[0].mxu0 %v1144
      %v1275 = vpop.f32.mrb[0].mxu0
      %v1276 = vadd.f32 %v1114, %v1275
      %v1277 = vpop.f32.mrb[0].mxu0
      %1278 = vmatprep.mubr.f32.mxu0 0.0
      %1279 = vmatmul.mubr.f32.gmra.mrb[0].mxu0 %v1147
      %v1280 = vpop.f32.mrb[0].mxu0
      %v1281 = vadd.f32 %v1114, %v1280
      %v1282 = vpop.f32.mrb[0].mxu0
      %1283 = vmatprep.mubr.f32.mxu0 0.0
      %1284 = vmatmul.mubr.f32.gmra.mrb[0].mxu0 %v1150
      %v1285 = vpop.f32.mrb[0].mxu0
      %v1286 = vadd.f32 %v1114, %v1285
      %v1287 = vpop.f32.mrb[0].mxu0
      %1288 = vmatprep.mubr.f32.mxu0 0.0
      %1289 = vmatmul.mubr.f32.gmra.mrb[0].mxu0 %v1153
      %v1290 = vpop.f32.mrb[0].mxu0
      %v1291 = vadd.f32 %v1114, %v1290
      %v1292 = vpop.f32.mrb[0].mxu0
      %1293 = vmatprep.mubr.f32.mxu0 0.0
      %1294 = vmatmul.mubr.f32.gmra.mrb[0].mxu0 %v1156
      %v1295 = vpop.f32.mrb[0].mxu0
      %v1296 = vadd.f32 %v1114, %v1295
      %v1297 = vpop.f32.mrb[0].mxu0
      %1298 = vmatprep.mubr.f32.mxu0 0.0
      %1299 = vmatmul.mubr.f32.gmra.mrb[0].mxu0 %v1159
      %v1300 = vpop.f32.mrb[0].mxu0
      %v1301 = vadd.f32 %v1114, %v1300
      %v1302 = vpop.f32.mrb[0].mxu0
      %1303 = vmatprep.mubr.f32.mxu0 0.0
      %1304 = vmatmul.mubr.f32.gmra.mrb[0].mxu0 %v1162
      %v1305 = vpop.f32.mrb[0].mxu0
      %v1306 = vadd.f32 %v1114, %v1305
      %v1307 = vpop.f32.mrb[0].mxu0
      %1308 = vdwg.mxu0
      %v1309 = vlaneseq
      %v1310 = vand.u32 %v1309, 127
      %vm1311 = vcmp.lt.s32.totalorder %v1310, 32
      %vm1312 = vcmp.gt.f32.partialorder %v1231, 0.0
      %vm1313 = vcmp.gt.f32.partialorder %v1236, 0.0
      %vm1314 = vcmp.gt.f32.partialorder %v1241, 0.0
      %vm1315 = vcmp.gt.f32.partialorder %v1246, 0.0
      %vm1316 = vcmp.gt.f32.partialorder %v1251, 0.0
      %vm1317 = vcmp.gt.f32.partialorder %v1256, 0.0
      %vm1318 = vcmp.gt.f32.partialorder %v1261, 0.0
      %vm1319 = vcmp.gt.f32.partialorder %v1266, 0.0
      %vm1320 = vcmp.gt.f32.partialorder %v1271, 0.0
      %vm1321 = vcmp.gt.f32.partialorder %v1276, 0.0
      %vm1322 = vcmp.gt.f32.partialorder %v1281, 0.0
      %vm1323 = vcmp.gt.f32.partialorder %v1286, 0.0
      %vm1324 = vcmp.gt.f32.partialorder %v1291, 0.0
      %vm1325 = vcmp.gt.f32.partialorder %v1296, 0.0
      %vm1326 = vcmp.gt.f32.partialorder %v1301, 0.0
      %vm1327 = vcmp.gt.f32.partialorder %v1306, 0.0
      %v1328 = vmul.f32 %v1231, 0.01
      %v1329 = vmul.f32 %v1236, 0.01
      %v1330 = vmul.f32 %v1241, 0.01
      %v1331 = vmul.f32 %v1246, 0.01
      %v1332 = vmul.f32 %v1251, 0.01
      %v1333 = vmul.f32 %v1256, 0.01
      %v1334 = vmul.f32 %v1261, 0.01
      %v1335 = vmul.f32 %v1266, 0.01
      %v1336 = vmul.f32 %v1271, 0.01
      %v1337 = vmul.f32 %v1276, 0.01
      %v1338 = vmul.f32 %v1281, 0.01
      %v1339 = vmul.f32 %v1286, 0.01
      %v1340 = vmul.f32 %v1291, 0.01
      %v1341 = vmul.f32 %v1296, 0.01
      %v1342 = vmul.f32 %v1301, 0.01
      %v1343 = vmul.f32 %v1306, 0.01
      %v1344 = vsel %vm1312, %v1231, %v1328
      %v1345 = vsel %vm1313, %v1236, %v1329
      %v1346 = vsel %vm1314, %v1241, %v1330
      %v1347 = vsel %vm1315, %v1246, %v1331
      %v1348 = vsel %vm1316, %v1251, %v1332
      %v1349 = vsel %vm1317, %v1256, %v1333
      %v1350 = vsel %vm1318, %v1261, %v1334
      %v1351 = vsel %vm1319, %v1266, %v1335
      %v1352 = vsel %vm1320, %v1271, %v1336
      %v1353 = vsel %vm1321, %v1276, %v1337
      %v1354 = vsel %vm1322, %v1281, %v1338
      %v1355 = vsel %vm1323, %v1286, %v1339
      %v1356 = vsel %vm1324, %v1291, %v1340
      %v1357 = vsel %vm1325, %v1296, %v1341
      %v1358 = vsel %vm1326, %v1301, %v1342
      %v1359 = vsel %vm1327, %v1306, %v1343
      %v1360 = vtanh.pop %v1231
      %v1361 = vtanh.pop %v1236
      %v1362 = vtanh.pop %v1241
      %v1363 = vtanh.pop %v1246
      %v1364 = vtanh.pop %v1251
      %v1365 = vtanh.pop %v1256
      %v1366 = vtanh.pop %v1261
      %v1367 = vtanh.pop %v1266
      %v1368 = vtanh.pop %v1271
      %v1369 = vtanh.pop %v1276
      %v1370 = vtanh.pop %v1281
      %v1371 = vtanh.pop %v1286
      %v1372 = vtanh.pop %v1291
      %v1373 = vtanh.pop %v1296
      %v1374 = vtanh.pop %v1301
      %v1375 = vtanh.pop %v1306
      %v1376 = vsel %vm1311, %v1344, %v1360
      %v1377 = vsel %vm1311, %v1345, %v1361
      %v1378 = vsel %vm1311, %v1346, %v1362
      %v1379 = vsel %vm1311, %v1347, %v1363
      %v1380 = vsel %vm1311, %v1348, %v1364
      %v1381 = vsel %vm1311, %v1349, %v1365
      %v1382 = vsel %vm1311, %v1350, %v1366
      %v1383 = vsel %vm1311, %v1351, %v1367
      %v1384 = vsel %vm1311, %v1352, %v1368
      %v1385 = vsel %vm1311, %v1353, %v1369
      %v1386 = vsel %vm1311, %v1354, %v1370
      %v1387 = vsel %vm1311, %v1355, %v1371
      %v1388 = vsel %vm1311, %v1356, %v1372
      %v1389 = vsel %vm1311, %v1357, %v1373
      %v1390 = vsel %vm1311, %v1358, %v1374
      %v1391 = vsel %vm1311, %v1359, %v1375
      %v1392 = vld [vmem:[%s1 + $0x70] sm:$0xff]
      %v1393 = vld [vmem:[%s1 + $0x78] sm:$0xff]
      %v1394 = vld [vmem:[%s1 + $0x80] sm:$0xff]
      %v1395 = vld [vmem:[%s1 + $0x88] sm:$0xff]
      %v1396 = vld [vmem:[%s1 + $0x90] sm:$0xff]
      %v1397 = vld [vmem:[%s1 + $0x98] sm:$0xff]
      %v1398 = vld [vmem:[%s1 + $0xa0] sm:$0xff]
      %v1399 = vld [vmem:[%s1 + $0xa8] sm:$0xff]
      %v1400 = vld [vmem:[%s1 + $0xd4] sm:$0x1]
      %v1401 = vlaneseq
      %v1402 = vshrl.u32 %v1401, 7
      %v1403 = vsub.s32 0, %v1402
      %v1404 = vrot.slane %v1400, %v1403
      %vm1405 = vcmask 523264
      %v1407 = vsel %vm1405, %v1376, 0
      %v1410 = vsel %vm1405, %v1377, 0
      %v1413 = vsel %vm1405, %v1378, 0
      %v1416 = vsel %vm1405, %v1379, 0
      %v1419 = vsel %vm1405, %v1380, 0
      %v1422 = vsel %vm1405, %v1381, 0
      %v1425 = vsel %vm1405, %v1382, 0
      %v1428 = vsel %vm1405, %v1383, 0
      %v1431 = vsel %vm1405, %v1384, 0
      %v1434 = vsel %vm1405, %v1385, 0
      %v1437 = vsel %vm1405, %v1386, 0
      %v1440 = vsel %vm1405, %v1387, 0
      %v1443 = vsel %vm1405, %v1388, 0
      %v1446 = vsel %vm1405, %v1389, 0
      %v1449 = vsel %vm1405, %v1390, 0
      %v1452 = vsel %vm1405, %v1391, 0
      %1454 = vmatprep.subr.mxu0 0.0
      %1455 = vmatpush1.msra.mxu0 %v1392
      %1456 = vmatprep.subr.mxu0 0.0
      %1457 = vmatpush1.msra.mxu0 %v1393
      %1458 = vmatprep.subr.mxu0 0.0
      %1459 = vmatpush1.msra.mxu0 %v1394
      %1460 = vmatprep.subr.mxu0 0.0
      %1461 = vmatpush1.msra.mxu0 %v1395
      %1462 = vmatprep.subr.mxu0 0.0
      %1463 = vmatpush1.msra.mxu0 %v1396
      %1464 = vmatprep.subr.mxu0 0.0
      %1465 = vmatpush1.msra.mxu0 %v1397
      %1466 = vmatprep.subr.mxu0 0.0
      %1467 = vmatpush1.msra.mxu0 %v1398
      %1468 = vmatprep.subr.mxu0 0.0
      %1469 = vmatpush1.msra.mxu0 %v1399
      %1470 = vmatprep.subr.mxu0 0.0
      %1471 = vmatpush1.msra.mxu0 0.0
      %1472 = vmatprep.subr.mxu0 0.0
      %1473 = vmatpush1.msra.mxu0 0.0
      %1474 = vmatprep.subr.mxu0 0.0
      %1475 = vmatpush1.msra.mxu0 0.0
      %1476 = vmatprep.subr.mxu0 0.0
      %1477 = vmatpush1.msra.mxu0 0.0
      %1478 = vmatprep.subr.mxu0 0.0
      %1479 = vmatpush1.msra.mxu0 0.0
      %1480 = vmatprep.subr.mxu0 0.0
      %1481 = vmatpush1.msra.mxu0 0.0
      %1482 = vmatprep.subr.mxu0 0.0
      %1483 = vmatpush1.msra.mxu0 0.0
      %1484 = vmatprep.subr.mxu0 0.0
      %1485 = vmatpush1.msra.mxu0 0.0
      %1486 = vmatprep.subr.mxu0 0.0
      %1487 = vmatpush1.msra.mxu0 0.0
      %1488 = vmatprep.subr.mxu0 0.0
      %1489 = vmatpush1.msra.mxu0 0.0
      %1490 = vmatprep.subr.mxu0 0.0
      %1491 = vmatpush1.msra.mxu0 0.0
      %1492 = vmatprep.subr.mxu0 0.0
      %1493 = vmatpush1.msra.mxu0 0.0
      %1494 = vmatprep.subr.mxu0 0.0
      %1495 = vmatpush1.msra.mxu0 0.0
      %1496 = vmatprep.subr.mxu0 0.0
      %1497 = vmatpush1.msra.mxu0 0.0
      %1498 = vmatprep.subr.mxu0 0.0
      %1499 = vmatpush1.msra.mxu0 0.0
      %1500 = vmatprep.subr.mxu0 0.0
      %1501 = vmatpush1.msra.mxu0 0.0
      %1502 = vmatprep.subr.mxu0 0.0
      %1503 = vmatpush1.msra.mxu0 0.0
      %1504 = vmatprep.subr.mxu0 0.0
      %1505 = vmatpush1.msra.mxu0 0.0
      %1506 = vmatprep.subr.mxu0 0.0
      %1507 = vmatpush1.msra.mxu0 0.0
      %1508 = vmatprep.subr.mxu0 0.0
      %1509 = vmatpush1.msra.mxu0 0.0
      %1510 = vmatprep.subr.mxu0 0.0
      %1511 = vmatpush1.msra.mxu0 0.0
      %1512 = vmatprep.subr.mxu0 0.0
      %1513 = vmatpush1.msra.mxu0 0.0
      %1514 = vmatprep.subr.mxu0 0.0
      %1515 = vmatpush1.msra.mxu0 0.0
      %1516 = vmatprep.subr.mxu0 0.0
      %1517 = vmatpush1.msra.mxu0 0.0
      %1518 = vmatprep.mubr.f32.mxu0 0.0
      %1519 = vmatmul.mubr.f32.gmra.mrb[0].mxu0 %v1407
      %v1520 = vpop.f32.mrb[0].mxu0
      %v1521 = vadd.f32 %v1404, %v1520
      %v1522 = vpop.f32.mrb[0].mxu0
      %1523 = vmatprep.mubr.f32.mxu0 0.0
      %1524 = vmatmul.mubr.f32.gmra.mrb[0].mxu0 %v1410
      %v1525 = vpop.f32.mrb[0].mxu0
      %v1526 = vadd.f32 %v1404, %v1525
      %v1527 = vpop.f32.mrb[0].mxu0
      %1528 = vmatprep.mubr.f32.mxu0 0.0
      %1529 = vmatmul.mubr.f32.gmra.mrb[0].mxu0 %v1413
      %v1530 = vpop.f32.mrb[0].mxu0
      %v1531 = vadd.f32 %v1404, %v1530
      %v1532 = vpop.f32.mrb[0].mxu0
      %1533 = vmatprep.mubr.f32.mxu0 0.0
      %1534 = vmatmul.mubr.f32.gmra.mrb[0].mxu0 %v1416
      %v1535 = vpop.f32.mrb[0].mxu0
      %v1536 = vadd.f32 %v1404, %v1535
      %v1537 = vpop.f32.mrb[0].mxu0
      %1538 = vmatprep.mubr.f32.mxu0 0.0
      %1539 = vmatmul.mubr.f32.gmra.mrb[0].mxu0 %v1419
      %v1540 = vpop.f32.mrb[0].mxu0
      %v1541 = vadd.f32 %v1404, %v1540
      %v1542 = vpop.f32.mrb[0].mxu0
      %1543 = vmatprep.mubr.f32.mxu0 0.0
      %1544 = vmatmul.mubr.f32.gmra.mrb[0].mxu0 %v1422
      %v1545 = vpop.f32.mrb[0].mxu0
      %v1546 = vadd.f32 %v1404, %v1545
      %v1547 = vpop.f32.mrb[0].mxu0
      %1548 = vmatprep.mubr.f32.mxu0 0.0
      %1549 = vmatmul.mubr.f32.gmra.mrb[0].mxu0 %v1425
      %v1550 = vpop.f32.mrb[0].mxu0
      %v1551 = vadd.f32 %v1404, %v1550
      %v1552 = vpop.f32.mrb[0].mxu0
      %1553 = vmatprep.mubr.f32.mxu0 0.0
      %1554 = vmatmul.mubr.f32.gmra.mrb[0].mxu0 %v1428
      %v1555 = vpop.f32.mrb[0].mxu0
      %v1556 = vadd.f32 %v1404, %v1555
      %v1557 = vpop.f32.mrb[0].mxu0
      %1558 = vmatprep.mubr.f32.mxu0 0.0
      %1559 = vmatmul.mubr.f32.gmra.mrb[0].mxu0 %v1431
      %v1560 = vpop.f32.mrb[0].mxu0
      %v1561 = vadd.f32 %v1404, %v1560
      %v1562 = vpop.f32.mrb[0].mxu0
      %1563 = vmatprep.mubr.f32.mxu0 0.0
      %1564 = vmatmul.mubr.f32.gmra.mrb[0].mxu0 %v1434
      %v1565 = vpop.f32.mrb[0].mxu0
      %v1566 = vadd.f32 %v1404, %v1565
      %v1567 = vpop.f32.mrb[0].mxu0
      %1568 = vmatprep.mubr.f32.mxu0 0.0
      %1569 = vmatmul.mubr.f32.gmra.mrb[0].mxu0 %v1437
      %v1570 = vpop.f32.mrb[0].mxu0
      %v1571 = vadd.f32 %v1404, %v1570
      %v1572 = vpop.f32.mrb[0].mxu0
      %1573 = vmatprep.mubr.f32.mxu0 0.0
      %1574 = vmatmul.mubr.f32.gmra.mrb[0].mxu0 %v1440
      %v1575 = vpop.f32.mrb[0].mxu0
      %v1576 = vadd.f32 %v1404, %v1575
      %v1577 = vpop.f32.mrb[0].mxu0
      %1578 = vmatprep.mubr.f32.mxu0 0.0
      %1579 = vmatmul.mubr.f32.gmra.mrb[0].mxu0 %v1443
      %v1580 = vpop.f32.mrb[0].mxu0
      %v1581 = vadd.f32 %v1404, %v1580
      %v1582 = vpop.f32.mrb[0].mxu0
      %1583 = vmatprep.mubr.f32.mxu0 0.0
      %1584 = vmatmul.mubr.f32.gmra.mrb[0].mxu0 %v1446
      %v1585 = vpop.f32.mrb[0].mxu0
      %v1586 = vadd.f32 %v1404, %v1585
      %v1587 = vpop.f32.mrb[0].mxu0
      %1588 = vmatprep.mubr.f32.mxu0 0.0
      %1589 = vmatmul.mubr.f32.gmra.mrb[0].mxu0 %v1449
      %v1590 = vpop.f32.mrb[0].mxu0
      %v1591 = vadd.f32 %v1404, %v1590
      %v1592 = vpop.f32.mrb[0].mxu0
      %1593 = vmatprep.mubr.f32.mxu0 0.0
      %1594 = vmatmul.mubr.f32.gmra.mrb[0].mxu0 %v1452
      %v1595 = vpop.f32.mrb[0].mxu0
      %v1596 = vadd.f32 %v1404, %v1595
      %v1597 = vpop.f32.mrb[0].mxu0
      %1598 = vdwg.mxu0
      %vm1599 = vcmp.gt.f32.partialorder %v1521, 0.0
      %vm1600 = vcmp.gt.f32.partialorder %v1526, 0.0
      %vm1601 = vcmp.gt.f32.partialorder %v1531, 0.0
      %vm1602 = vcmp.gt.f32.partialorder %v1536, 0.0
      %vm1603 = vcmp.gt.f32.partialorder %v1541, 0.0
      %vm1604 = vcmp.gt.f32.partialorder %v1546, 0.0
      %vm1605 = vcmp.gt.f32.partialorder %v1551, 0.0
      %vm1606 = vcmp.gt.f32.partialorder %v1556, 0.0
      %vm1607 = vcmp.gt.f32.partialorder %v1561, 0.0
      %vm1608 = vcmp.gt.f32.partialorder %v1566, 0.0
      %vm1609 = vcmp.gt.f32.partialorder %v1571, 0.0
      %vm1610 = vcmp.gt.f32.partialorder %v1576, 0.0
      %vm1611 = vcmp.gt.f32.partialorder %v1581, 0.0
      %vm1612 = vcmp.gt.f32.partialorder %v1586, 0.0
      %vm1613 = vcmp.gt.f32.partialorder %v1591, 0.0
      %vm1614 = vcmp.gt.f32.partialorder %v1596, 0.0
      %v1615 = vmul.f32 %v1521, 0.01
      %v1616 = vmul.f32 %v1526, 0.01
      %v1617 = vmul.f32 %v1531, 0.01
      %v1618 = vmul.f32 %v1536, 0.01
      %v1619 = vmul.f32 %v1541, 0.01
      %v1620 = vmul.f32 %v1546, 0.01
      %v1621 = vmul.f32 %v1551, 0.01
      %v1622 = vmul.f32 %v1556, 0.01
      %v1623 = vmul.f32 %v1561, 0.01
      %v1624 = vmul.f32 %v1566, 0.01
      %v1625 = vmul.f32 %v1571, 0.01
      %v1626 = vmul.f32 %v1576, 0.01
      %v1627 = vmul.f32 %v1581, 0.01
      %v1628 = vmul.f32 %v1586, 0.01
      %v1629 = vmul.f32 %v1591, 0.01
      %v1630 = vmul.f32 %v1596, 0.01
      %v1631 = vsel %vm1599, %v1521, %v1615
      %v1632 = vsel %vm1600, %v1526, %v1616
      %v1633 = vsel %vm1601, %v1531, %v1617
      %v1634 = vsel %vm1602, %v1536, %v1618
      %v1635 = vsel %vm1603, %v1541, %v1619
      %v1636 = vsel %vm1604, %v1546, %v1620
      %v1637 = vsel %vm1605, %v1551, %v1621
      %v1638 = vsel %vm1606, %v1556, %v1622
      %v1639 = vsel %vm1607, %v1561, %v1623
      %v1640 = vsel %vm1608, %v1566, %v1624
      %v1641 = vsel %vm1609, %v1571, %v1625
      %v1642 = vsel %vm1610, %v1576, %v1626
      %v1643 = vsel %vm1611, %v1581, %v1627
      %v1644 = vsel %vm1612, %v1586, %v1628
      %v1645 = vsel %vm1613, %v1591, %v1629
      %v1646 = vsel %vm1614, %v1596, %v1630
      %v1647 = vld [vmem:[%s1 + $0xb0] sm:$0xff]
      %v1648 = vld [vmem:[%s1 + $0xb8] sm:$0xff]
      %v1649 = vld [vmem:[%s1 + $0xc0] sm:$0xff]
      %v1650 = vld [vmem:[%s1 + $0xc8] sm:$0xff]
      %v1651 = vld [vmem:[%s1 + $0xd5] sm:$0x1]
      %v1652 = vlaneseq
      %v1653 = vshrl.u32 %v1652, 7
      %v1654 = vsub.s32 0, %v1653
      %v1655 = vrot.slane %v1651, %v1654
      %v1657 = vsel %vm172, %v1631, 0
      %v1660 = vsel %vm172, %v1632, 0
      %v1663 = vsel %vm172, %v1633, 0
      %v1666 = vsel %vm172, %v1634, 0
      %v1669 = vsel %vm172, %v1635, 0
      %v1672 = vsel %vm172, %v1636, 0
      %v1675 = vsel %vm172, %v1637, 0
      %v1678 = vsel %vm172, %v1638, 0
      %v1681 = vsel %vm172, %v1639, 0
      %v1684 = vsel %vm172, %v1640, 0
      %v1687 = vsel %vm172, %v1641, 0
      %v1690 = vsel %vm172, %v1642, 0
      %v1693 = vsel %vm172, %v1643, 0
      %v1696 = vsel %vm172, %v1644, 0
      %v1699 = vsel %vm172, %v1645, 0
      %v1702 = vsel %vm172, %v1646, 0
      %1704 = vmatprep.subr.mxu0 0.0
      %1705 = vmatpush1.msra.mxu0 %v1647
      %1706 = vmatprep.subr.mxu0 0.0
      %1707 = vmatpush1.msra.mxu0 %v1648
      %1708 = vmatprep.subr.mxu0 0.0
      %1709 = vmatpush1.msra.mxu0 %v1649
      %1710 = vmatprep.subr.mxu0 0.0
      %1711 = vmatpush1.msra.mxu0 %v1650
      %1712 = vmatprep.subr.mxu0 0.0
      %1713 = vmatpush1.msra.mxu0 0.0
      %1714 = vmatprep.subr.mxu0 0.0
      %1715 = vmatpush1.msra.mxu0 0.0
      %1716 = vmatprep.subr.mxu0 0.0
      %1717 = vmatpush1.msra.mxu0 0.0
      %1718 = vmatprep.subr.mxu0 0.0
      %1719 = vmatpush1.msra.mxu0 0.0
      %1720 = vmatprep.subr.mxu0 0.0
      %1721 = vmatpush1.msra.mxu0 0.0
      %1722 = vmatprep.subr.mxu0 0.0
      %1723 = vmatpush1.msra.mxu0 0.0
      %1724 = vmatprep.subr.mxu0 0.0
      %1725 = vmatpush1.msra.mxu0 0.0
      %1726 = vmatprep.subr.mxu0 0.0
      %1727 = vmatpush1.msra.mxu0 0.0
      %1728 = vmatprep.subr.mxu0 0.0
      %1729 = vmatpush1.msra.mxu0 0.0
      %1730 = vmatprep.subr.mxu0 0.0
      %1731 = vmatpush1.msra.mxu0 0.0
      %1732 = vmatprep.subr.mxu0 0.0
      %1733 = vmatpush1.msra.mxu0 0.0
      %1734 = vmatprep.subr.mxu0 0.0
      %1735 = vmatpush1.msra.mxu0 0.0
      %1736 = vmatprep.subr.mxu0 0.0
      %1737 = vmatpush1.msra.mxu0 0.0
      %1738 = vmatprep.subr.mxu0 0.0
      %1739 = vmatpush1.msra.mxu0 0.0
      %1740 = vmatprep.subr.mxu0 0.0
      %1741 = vmatpush1.msra.mxu0 0.0
      %1742 = vmatprep.subr.mxu0 0.0
      %1743 = vmatpush1.msra.mxu0 0.0
      %1744 = vmatprep.subr.mxu0 0.0
      %1745 = vmatpush1.msra.mxu0 0.0
      %1746 = vmatprep.subr.mxu0 0.0
      %1747 = vmatpush1.msra.mxu0 0.0
      %1748 = vmatprep.subr.mxu0 0.0
      %1749 = vmatpush1.msra.mxu0 0.0
      %1750 = vmatprep.subr.mxu0 0.0
      %1751 = vmatpush1.msra.mxu0 0.0
      %1752 = vmatprep.subr.mxu0 0.0
      %1753 = vmatpush1.msra.mxu0 0.0
      %1754 = vmatprep.subr.mxu0 0.0
      %1755 = vmatpush1.msra.mxu0 0.0
      %1756 = vmatprep.subr.mxu0 0.0
      %1757 = vmatpush1.msra.mxu0 0.0
      %1758 = vmatprep.subr.mxu0 0.0
      %1759 = vmatpush1.msra.mxu0 0.0
      %1760 = vmatprep.subr.mxu0 0.0
      %1761 = vmatpush1.msra.mxu0 0.0
      %1762 = vmatprep.subr.mxu0 0.0
      %1763 = vmatpush1.msra.mxu0 0.0
      %1764 = vmatprep.subr.mxu0 0.0
      %1765 = vmatpush1.msra.mxu0 0.0
      %1766 = vmatprep.subr.mxu0 0.0
      %1767 = vmatpush1.msra.mxu0 0.0
      %1768 = vmatprep.mubr.f32.mxu0 0.0
      %1769 = vmatmul.mubr.f32.gmra.mrb[0].mxu0 %v1657
      %v1770 = vpop.f32.mrb[0].mxu0
      %v1771 = vadd.f32 %v1655, %v1770
      %v1772 = vpop.f32.mrb[0].mxu0
      %1773 = vmatprep.mubr.f32.mxu0 0.0
      %1774 = vmatmul.mubr.f32.gmra.mrb[0].mxu0 %v1660
      %v1775 = vpop.f32.mrb[0].mxu0
      %v1776 = vadd.f32 %v1655, %v1775
      %v1777 = vpop.f32.mrb[0].mxu0
      %1778 = vmatprep.mubr.f32.mxu0 0.0
      %1779 = vmatmul.mubr.f32.gmra.mrb[0].mxu0 %v1663
      %v1780 = vpop.f32.mrb[0].mxu0
      %v1781 = vadd.f32 %v1655, %v1780
      %v1782 = vpop.f32.mrb[0].mxu0
      %1783 = vmatprep.mubr.f32.mxu0 0.0
      %1784 = vmatmul.mubr.f32.gmra.mrb[0].mxu0 %v1666
      %v1785 = vpop.f32.mrb[0].mxu0
      %v1786 = vadd.f32 %v1655, %v1785
      %v1787 = vpop.f32.mrb[0].mxu0
      %1788 = vmatprep.mubr.f32.mxu0 0.0
      %1789 = vmatmul.mubr.f32.gmra.mrb[0].mxu0 %v1669
      %v1790 = vpop.f32.mrb[0].mxu0
      %v1791 = vadd.f32 %v1655, %v1790
      %v1792 = vpop.f32.mrb[0].mxu0
      %1793 = vmatprep.mubr.f32.mxu0 0.0
      %1794 = vmatmul.mubr.f32.gmra.mrb[0].mxu0 %v1672
      %v1795 = vpop.f32.mrb[0].mxu0
      %v1796 = vadd.f32 %v1655, %v1795
      %v1797 = vpop.f32.mrb[0].mxu0
      %1798 = vmatprep.mubr.f32.mxu0 0.0
      %1799 = vmatmul.mubr.f32.gmra.mrb[0].mxu0 %v1675
      %v1800 = vpop.f32.mrb[0].mxu0
      %v1801 = vadd.f32 %v1655, %v1800
      %v1802 = vpop.f32.mrb[0].mxu0
      %1803 = vmatprep.mubr.f32.mxu0 0.0
      %1804 = vmatmul.mubr.f32.gmra.mrb[0].mxu0 %v1678
      %v1805 = vpop.f32.mrb[0].mxu0
      %v1806 = vadd.f32 %v1655, %v1805
      %v1807 = vpop.f32.mrb[0].mxu0
      %1808 = vmatprep.mubr.f32.mxu0 0.0
      %1809 = vmatmul.mubr.f32.gmra.mrb[0].mxu0 %v1681
      %v1810 = vpop.f32.mrb[0].mxu0
      %v1811 = vadd.f32 %v1655, %v1810
      %v1812 = vpop.f32.mrb[0].mxu0
      %1813 = vmatprep.mubr.f32.mxu0 0.0
      %1814 = vmatmul.mubr.f32.gmra.mrb[0].mxu0 %v1684
      %v1815 = vpop.f32.mrb[0].mxu0
      %v1816 = vadd.f32 %v1655, %v1815
      %v1817 = vpop.f32.mrb[0].mxu0
      %1818 = vmatprep.mubr.f32.mxu0 0.0
      %1819 = vmatmul.mubr.f32.gmra.mrb[0].mxu0 %v1687
      %v1820 = vpop.f32.mrb[0].mxu0
      %v1821 = vadd.f32 %v1655, %v1820
      %v1822 = vpop.f32.mrb[0].mxu0
      %1823 = vmatprep.mubr.f32.mxu0 0.0
      %1824 = vmatmul.mubr.f32.gmra.mrb[0].mxu0 %v1690
      %v1825 = vpop.f32.mrb[0].mxu0
      %v1826 = vadd.f32 %v1655, %v1825
      %v1827 = vpop.f32.mrb[0].mxu0
      %1828 = vmatprep.mubr.f32.mxu0 0.0
      %1829 = vmatmul.mubr.f32.gmra.mrb[0].mxu0 %v1693
      %v1830 = vpop.f32.mrb[0].mxu0
      %v1831 = vadd.f32 %v1655, %v1830
      %v1832 = vpop.f32.mrb[0].mxu0
      %1833 = vmatprep.mubr.f32.mxu0 0.0
      %1834 = vmatmul.mubr.f32.gmra.mrb[0].mxu0 %v1696
      %v1835 = vpop.f32.mrb[0].mxu0
      %v1836 = vadd.f32 %v1655, %v1835
      %v1837 = vpop.f32.mrb[0].mxu0
      %1838 = vmatprep.mubr.f32.mxu0 0.0
      %1839 = vmatmul.mubr.f32.gmra.mrb[0].mxu0 %v1699
      %v1840 = vpop.f32.mrb[0].mxu0
      %v1841 = vadd.f32 %v1655, %v1840
      %v1842 = vpop.f32.mrb[0].mxu0
      %1843 = vmatprep.mubr.f32.mxu0 0.0
      %1844 = vmatmul.mubr.f32.gmra.mrb[0].mxu0 %v1702
      %v1845 = vpop.f32.mrb[0].mxu0
      %v1846 = vadd.f32 %v1655, %v1845
      %v1847 = vpop.f32.mrb[0].mxu0
      %1848 = vdwg.mxu0
      %vm1849 = vcmask 64512
      %v1850 = vsel %vm1849, %v1771, -inf
      %1851 = vmax.xlane.f32.xlu0 %v1850
      %v1852 = vpop.xlane.xlu0 %1851
      %v1853 = vsel %vm1849, %v1776, -inf
      %1854 = vmax.xlane.f32.xlu0 %v1853
      %v1855 = vpop.xlane.xlu0 %1854
      %v1856 = vsel %vm1849, %v1781, -inf
      %1857 = vmax.xlane.f32.xlu0 %v1856
      %v1858 = vpop.xlane.xlu0 %1857
      %v1859 = vsel %vm1849, %v1786, -inf
      %1860 = vmax.xlane.f32.xlu0 %v1859
      %v1861 = vpop.xlane.xlu0 %1860
      %v1862 = vsel %vm1849, %v1791, -inf
      %1863 = vmax.xlane.f32.xlu0 %v1862
      %v1864 = vpop.xlane.xlu0 %1863
      %v1865 = vsel %vm1849, %v1796, -inf
      %1866 = vmax.xlane.f32.xlu0 %v1865
      %v1867 = vpop.xlane.xlu0 %1866
      %v1868 = vsel %vm1849, %v1801, -inf
      %1869 = vmax.xlane.f32.xlu0 %v1868
      %v1870 = vpop.xlane.xlu0 %1869
      %v1871 = vsel %vm1849, %v1806, -inf
      %1872 = vmax.xlane.f32.xlu0 %v1871
      %v1873 = vpop.xlane.xlu0 %1872
      %v1874 = vsel %vm1849, %v1811, -inf
      %1875 = vmax.xlane.f32.xlu0 %v1874
      %v1876 = vpop.xlane.xlu0 %1875
      %v1877 = vsel %vm1849, %v1816, -inf
      %1878 = vmax.xlane.f32.xlu0 %v1877
      %v1879 = vpop.xlane.xlu0 %1878
      %v1880 = vsel %vm1849, %v1821, -inf
      %1881 = vmax.xlane.f32.xlu0 %v1880
      %v1882 = vpop.xlane.xlu0 %1881
      %v1883 = vsel %vm1849, %v1826, -inf
      %1884 = vmax.xlane.f32.xlu0 %v1883
      %v1885 = vpop.xlane.xlu0 %1884
      %v1886 = vsel %vm1849, %v1831, -inf
      %1887 = vmax.xlane.f32.xlu0 %v1886
      %v1888 = vpop.xlane.xlu0 %1887
      %v1889 = vsel %vm1849, %v1836, -inf
      %1890 = vmax.xlane.f32.xlu0 %v1889
      %v1891 = vpop.xlane.xlu0 %1890
      %v1892 = vsel %vm1849, %v1841, -inf
      %1893 = vmax.xlane.f32.xlu0 %v1892
      %v1894 = vpop.xlane.xlu0 %1893
      %v1895 = vsel %vm1849, %v1846, -inf
      %1896 = vmax.xlane.f32.xlu0 %v1895
      %v1897 = vpop.xlane.xlu0 %1896
      %v1898 = vsub.f32 %v1771, %v1852
      %v1899 = vsub.f32 %v1776, %v1855
      %v1900 = vsub.f32 %v1781, %v1858
      %v1901 = vsub.f32 %v1786, %v1861
      %v1902 = vsub.f32 %v1791, %v1864
      %v1903 = vsub.f32 %v1796, %v1867
      %v1904 = vsub.f32 %v1801, %v1870
      %v1905 = vsub.f32 %v1806, %v1873
      %v1906 = vsub.f32 %v1811, %v1876
      %v1907 = vsub.f32 %v1816, %v1879
      %v1908 = vsub.f32 %v1821, %v1882
      %v1909 = vsub.f32 %v1826, %v1885
      %v1910 = vsub.f32 %v1831, %v1888
      %v1911 = vsub.f32 %v1836, %v1891
      %v1912 = vsub.f32 %v1841, %v1894
      %v1913 = vsub.f32 %v1846, %v1897
      %v1914 = vmul.f32 %v1898, 1.442695
      %v1915 = vpow.pop %v1914
      %v1916 = vmul.f32 %v1899, 1.442695
      %v1917 = vpow.pop %v1916
      %v1918 = vmul.f32 %v1900, 1.442695
      %v1919 = vpow.pop %v1918
      %v1920 = vmul.f32 %v1901, 1.442695
      %v1921 = vpow.pop %v1920
      %v1922 = vmul.f32 %v1902, 1.442695
      %v1923 = vpow.pop %v1922
      %v1924 = vmul.f32 %v1903, 1.442695
      %v1925 = vpow.pop %v1924
      %v1926 = vmul.f32 %v1904, 1.442695
      %v1927 = vpow.pop %v1926
      %v1928 = vmul.f32 %v1905, 1.442695
      %v1929 = vpow.pop %v1928
      %v1930 = vmul.f32 %v1906, 1.442695
      %v1931 = vpow.pop %v1930
      %v1932 = vmul.f32 %v1907, 1.442695
      %v1933 = vpow.pop %v1932
      %v1934 = vmul.f32 %v1908, 1.442695
      %v1935 = vpow.pop %v1934
      %v1936 = vmul.f32 %v1909, 1.442695
      %v1937 = vpow.pop %v1936
      %v1938 = vmul.f32 %v1910, 1.442695
      %v1939 = vpow.pop %v1938
      %v1940 = vmul.f32 %v1911, 1.442695
      %v1941 = vpow.pop %v1940
      %v1942 = vmul.f32 %v1912, 1.442695
      %v1943 = vpow.pop %v1942
      %v1944 = vmul.f32 %v1913, 1.442695
      %v1945 = vpow.pop %v1944
      %v1946 = vsel %vm1849, %v1915, 0.0
      %1947 = vadd.xlane.f32.xlu0 %v1946
      %v1948 = vpop.xlane.xlu0 %1947
      %v1949 = vsel %vm1849, %v1917, 0.0
      %1950 = vadd.xlane.f32.xlu0 %v1949
      %v1951 = vpop.xlane.xlu0 %1950
      %v1952 = vsel %vm1849, %v1919, 0.0
      %1953 = vadd.xlane.f32.xlu0 %v1952
      %v1954 = vpop.xlane.xlu0 %1953
      %v1955 = vsel %vm1849, %v1921, 0.0
      %1956 = vadd.xlane.f32.xlu0 %v1955
      %v1957 = vpop.xlane.xlu0 %1956
      %v1958 = vsel %vm1849, %v1923, 0.0
      %1959 = vadd.xlane.f32.xlu0 %v1958
      %v1960 = vpop.xlane.xlu0 %1959
      %v1961 = vsel %vm1849, %v1925, 0.0
      %1962 = vadd.xlane.f32.xlu0 %v1961
      %v1963 = vpop.xlane.xlu0 %1962
      %v1964 = vsel %vm1849, %v1927, 0.0
      %1965 = vadd.xlane.f32.xlu0 %v1964
      %v1966 = vpop.xlane.xlu0 %1965
      %v1967 = vsel %vm1849, %v1929, 0.0
      %1968 = vadd.xlane.f32.xlu0 %v1967
      %v1969 = vpop.xlane.xlu0 %1968
      %v1970 = vsel %vm1849, %v1931, 0.0
      %1971 = vadd.xlane.f32.xlu0 %v1970
      %v1972 = vpop.xlane.xlu0 %1971
      %v1973 = vsel %vm1849, %v1933, 0.0
      %1974 = vadd.xlane.f32.xlu0 %v1973
      %v1975 = vpop.xlane.xlu0 %1974
      %v1976 = vsel %vm1849, %v1935, 0.0
      %1977 = vadd.xlane.f32.xlu0 %v1976
      %v1978 = vpop.xlane.xlu0 %1977
      %v1979 = vsel %vm1849, %v1937, 0.0
      %1980 = vadd.xlane.f32.xlu0 %v1979
      %v1981 = vpop.xlane.xlu0 %1980
      %v1982 = vsel %vm1849, %v1939, 0.0
      %1983 = vadd.xlane.f32.xlu0 %v1982
      %v1984 = vpop.xlane.xlu0 %1983
      %v1985 = vsel %vm1849, %v1941, 0.0
      %1986 = vadd.xlane.f32.xlu0 %v1985
      %v1987 = vpop.xlane.xlu0 %1986
      %v1988 = vsel %vm1849, %v1943, 0.0
      %1989 = vadd.xlane.f32.xlu0 %v1988
      %v1990 = vpop.xlane.xlu0 %1989
      %v1991 = vsel %vm1849, %v1945, 0.0
      %1992 = vadd.xlane.f32.xlu0 %v1991
      %v1993 = vpop.xlane.xlu0 %1992
      %v1994 = vlog2.pop %v1948
      %v1995 = vmul.f32 %v1994, 0.6931472
      %v1996 = vlog2.pop %v1951
      %v1997 = vmul.f32 %v1996, 0.6931472
      %v1998 = vlog2.pop %v1954
      %v1999 = vmul.f32 %v1998, 0.6931472
      %v2000 = vlog2.pop %v1957
      %v2001 = vmul.f32 %v2000, 0.6931472
      %v2002 = vlog2.pop %v1960
      %v2003 = vmul.f32 %v2002, 0.6931472
      %v2004 = vlog2.pop %v1963
      %v2005 = vmul.f32 %v2004, 0.6931472
      %v2006 = vlog2.pop %v1966
      %v2007 = vmul.f32 %v2006, 0.6931472
      %v2008 = vlog2.pop %v1969
      %v2009 = vmul.f32 %v2008, 0.6931472
      %v2010 = vlog2.pop %v1972
      %v2011 = vmul.f32 %v2010, 0.6931472
      %v2012 = vlog2.pop %v1975
      %v2013 = vmul.f32 %v2012, 0.6931472
      %v2014 = vlog2.pop %v1978
      %v2015 = vmul.f32 %v2014, 0.6931472
      %v2016 = vlog2.pop %v1981
      %v2017 = vmul.f32 %v2016, 0.6931472
      %v2018 = vlog2.pop %v1984
      %v2019 = vmul.f32 %v2018, 0.6931472
      %v2020 = vlog2.pop %v1987
      %v2021 = vmul.f32 %v2020, 0.6931472
      %v2022 = vlog2.pop %v1990
      %v2023 = vmul.f32 %v2022, 0.6931472
      %v2024 = vlog2.pop %v1993
      %v2025 = vmul.f32 %v2024, 0.6931472
      %v2026 = vadd.f32 %v1852, %v1995
      %v2027 = vadd.f32 %v1855, %v1997
      %v2028 = vadd.f32 %v1858, %v1999
      %v2029 = vadd.f32 %v1861, %v2001
      %v2030 = vadd.f32 %v1864, %v2003
      %v2031 = vadd.f32 %v1867, %v2005
      %v2032 = vadd.f32 %v1870, %v2007
      %v2033 = vadd.f32 %v1873, %v2009
      %v2034 = vadd.f32 %v1876, %v2011
      %v2035 = vadd.f32 %v1879, %v2013
      %v2036 = vadd.f32 %v1882, %v2015
      %v2037 = vadd.f32 %v1885, %v2017
      %v2038 = vadd.f32 %v1888, %v2019
      %v2039 = vadd.f32 %v1891, %v2021
      %v2040 = vadd.f32 %v1894, %v2023
      %v2041 = vadd.f32 %v1897, %v2025
      %v2042 = vsub.f32 %v1771, %v2026
      %v2043 = vsub.f32 %v1776, %v2027
      %v2044 = vsub.f32 %v1781, %v2028
      %v2045 = vsub.f32 %v1786, %v2029
      %v2046 = vsub.f32 %v1791, %v2030
      %v2047 = vsub.f32 %v1796, %v2031
      %v2048 = vsub.f32 %v1801, %v2032
      %v2049 = vsub.f32 %v1806, %v2033
      %v2050 = vsub.f32 %v1811, %v2034
      %v2051 = vsub.f32 %v1816, %v2035
      %v2052 = vsub.f32 %v1821, %v2036
      %v2053 = vsub.f32 %v1826, %v2037
      %v2054 = vsub.f32 %v1831, %v2038
      %v2055 = vsub.f32 %v1836, %v2039
      %v2056 = vsub.f32 %v1841, %v2040
      %v2057 = vsub.f32 %v1846, %v2041
      %vm2058 = vcmask 130112
      %v2059 = vsel %vm2058, %v1771, -inf
      %2060 = vmax.xlane.f32.xlu0 %v2059
      %v2061 = vpop.xlane.xlu0 %2060
      %v2062 = vsel %vm2058, %v1776, -inf
      %2063 = vmax.xlane.f32.xlu0 %v2062
      %v2064 = vpop.xlane.xlu0 %2063
      %v2065 = vsel %vm2058, %v1781, -inf
      %2066 = vmax.xlane.f32.xlu0 %v2065
      %v2067 = vpop.xlane.xlu0 %2066
      %v2068 = vsel %vm2058, %v1786, -inf
      %2069 = vmax.xlane.f32.xlu0 %v2068
      %v2070 = vpop.xlane.xlu0 %2069
      %v2071 = vsel %vm2058, %v1791, -inf
      %2072 = vmax.xlane.f32.xlu0 %v2071
      %v2073 = vpop.xlane.xlu0 %2072
      %v2074 = vsel %vm2058, %v1796, -inf
      %2075 = vmax.xlane.f32.xlu0 %v2074
      %v2076 = vpop.xlane.xlu0 %2075
      %v2077 = vsel %vm2058, %v1801, -inf
      %2078 = vmax.xlane.f32.xlu0 %v2077
      %v2079 = vpop.xlane.xlu0 %2078
      %v2080 = vsel %vm2058, %v1806, -inf
      %2081 = vmax.xlane.f32.xlu0 %v2080
      %v2082 = vpop.xlane.xlu0 %2081
      %v2083 = vsel %vm2058, %v1811, -inf
      %2084 = vmax.xlane.f32.xlu0 %v2083
      %v2085 = vpop.xlane.xlu0 %2084
      %v2086 = vsel %vm2058, %v1816, -inf
      %2087 = vmax.xlane.f32.xlu0 %v2086
      %v2088 = vpop.xlane.xlu0 %2087
      %v2089 = vsel %vm2058, %v1821, -inf
      %2090 = vmax.xlane.f32.xlu0 %v2089
      %v2091 = vpop.xlane.xlu0 %2090
      %v2092 = vsel %vm2058, %v1826, -inf
      %2093 = vmax.xlane.f32.xlu0 %v2092
      %v2094 = vpop.xlane.xlu0 %2093
      %v2095 = vsel %vm2058, %v1831, -inf
      %2096 = vmax.xlane.f32.xlu0 %v2095
      %v2097 = vpop.xlane.xlu0 %2096
      %v2098 = vsel %vm2058, %v1836, -inf
      %2099 = vmax.xlane.f32.xlu0 %v2098
      %v2100 = vpop.xlane.xlu0 %2099
      %v2101 = vsel %vm2058, %v1841, -inf
      %2102 = vmax.xlane.f32.xlu0 %v2101
      %v2103 = vpop.xlane.xlu0 %2102
      %v2104 = vsel %vm2058, %v1846, -inf
      %2105 = vmax.xlane.f32.xlu0 %v2104
      %v2106 = vpop.xlane.xlu0 %2105
      %v2107 = vsub.f32 %v1771, %v2061
      %v2108 = vsub.f32 %v1776, %v2064
      %v2109 = vsub.f32 %v1781, %v2067
      %v2110 = vsub.f32 %v1786, %v2070
      %v2111 = vsub.f32 %v1791, %v2073
      %v2112 = vsub.f32 %v1796, %v2076
      %v2113 = vsub.f32 %v1801, %v2079
      %v2114 = vsub.f32 %v1806, %v2082
      %v2115 = vsub.f32 %v1811, %v2085
      %v2116 = vsub.f32 %v1816, %v2088
      %v2117 = vsub.f32 %v1821, %v2091
      %v2118 = vsub.f32 %v1826, %v2094
      %v2119 = vsub.f32 %v1831, %v2097
      %v2120 = vsub.f32 %v1836, %v2100
      %v2121 = vsub.f32 %v1841, %v2103
      %v2122 = vsub.f32 %v1846, %v2106
      %v2123 = vmul.f32 %v2107, 1.442695
      %v2124 = vpow.pop %v2123
      %v2125 = vmul.f32 %v2108, 1.442695
      %v2126 = vpow.pop %v2125
      %v2127 = vmul.f32 %v2109, 1.442695
      %v2128 = vpow.pop %v2127
      %v2129 = vmul.f32 %v2110, 1.442695
      %v2130 = vpow.pop %v2129
      %v2131 = vmul.f32 %v2111, 1.442695
      %v2132 = vpow.pop %v2131
      %v2133 = vmul.f32 %v2112, 1.442695
      %v2134 = vpow.pop %v2133
      %v2135 = vmul.f32 %v2113, 1.442695
      %v2136 = vpow.pop %v2135
      %v2137 = vmul.f32 %v2114, 1.442695
      %v2138 = vpow.pop %v2137
      %v2139 = vmul.f32 %v2115, 1.442695
      %v2140 = vpow.pop %v2139
      %v2141 = vmul.f32 %v2116, 1.442695
      %v2142 = vpow.pop %v2141
      %v2143 = vmul.f32 %v2117, 1.442695
      %v2144 = vpow.pop %v2143
      %v2145 = vmul.f32 %v2118, 1.442695
      %v2146 = vpow.pop %v2145
      %v2147 = vmul.f32 %v2119, 1.442695
      %v2148 = vpow.pop %v2147
      %v2149 = vmul.f32 %v2120, 1.442695
      %v2150 = vpow.pop %v2149
      %v2151 = vmul.f32 %v2121, 1.442695
      %v2152 = vpow.pop %v2151
      %v2153 = vmul.f32 %v2122, 1.442695
      %v2154 = vpow.pop %v2153
      %2171 = vrot.lane.b32.xlu0 %v2124, 120
      %v2172 = vpop.permute.xlu0 %2171
      %2173 = vrot.lane.b32.xlu0 %v2126, 120
      %v2174 = vpop.permute.xlu0 %2173
      %2175 = vrot.lane.b32.xlu0 %v2128, 120
      %v2176 = vpop.permute.xlu0 %2175
      %2177 = vrot.lane.b32.xlu0 %v2130, 120
      %v2178 = vpop.permute.xlu0 %2177
      %2179 = vrot.lane.b32.xlu0 %v2132, 120
      %v2180 = vpop.permute.xlu0 %2179
      %2181 = vrot.lane.b32.xlu0 %v2134, 120
      %v2182 = vpop.permute.xlu0 %2181
      %2183 = vrot.lane.b32.xlu0 %v2136, 120
      %v2184 = vpop.permute.xlu0 %2183
      %2185 = vrot.lane.b32.xlu0 %v2138, 120
      %v2186 = vpop.permute.xlu0 %2185
      %2187 = vrot.lane.b32.xlu0 %v2140, 120
      %v2188 = vpop.permute.xlu0 %2187
      %2189 = vrot.lane.b32.xlu0 %v2142, 120
      %v2190 = vpop.permute.xlu0 %2189
      %2191 = vrot.lane.b32.xlu0 %v2144, 120
      %v2192 = vpop.permute.xlu0 %2191
      %2193 = vrot.lane.b32.xlu0 %v2146, 120
      %v2194 = vpop.permute.xlu0 %2193
      %2195 = vrot.lane.b32.xlu0 %v2148, 120
      %v2196 = vpop.permute.xlu0 %2195
      %2197 = vrot.lane.b32.xlu0 %v2150, 120
      %v2198 = vpop.permute.xlu0 %2197
      %2199 = vrot.lane.b32.xlu0 %v2152, 120
      %v2200 = vpop.permute.xlu0 %2199
      %2201 = vrot.lane.b32.xlu0 %v2154, 120
      %v2202 = vpop.permute.xlu0 %2201
      %v2219 = vsel %vm1849, %v2172, 0.0
      %2220 = vadd.xlane.f32.xlu0 %v2219
      %v2221 = vpop.xlane.xlu0 %2220
      %v2222 = vsel %vm1849, %v2174, 0.0
      %2223 = vadd.xlane.f32.xlu0 %v2222
      %v2224 = vpop.xlane.xlu0 %2223
      %v2225 = vsel %vm1849, %v2176, 0.0
      %2226 = vadd.xlane.f32.xlu0 %v2225
      %v2227 = vpop.xlane.xlu0 %2226
      %v2228 = vsel %vm1849, %v2178, 0.0
      %2229 = vadd.xlane.f32.xlu0 %v2228
      %v2230 = vpop.xlane.xlu0 %2229
      %v2231 = vsel %vm1849, %v2180, 0.0
      %2232 = vadd.xlane.f32.xlu0 %v2231
      %v2233 = vpop.xlane.xlu0 %2232
      %v2234 = vsel %vm1849, %v2182, 0.0
      %2235 = vadd.xlane.f32.xlu0 %v2234
      %v2236 = vpop.xlane.xlu0 %2235
      %v2237 = vsel %vm1849, %v2184, 0.0
      %2238 = vadd.xlane.f32.xlu0 %v2237
      %v2239 = vpop.xlane.xlu0 %2238
      %v2240 = vsel %vm1849, %v2186, 0.0
      %2241 = vadd.xlane.f32.xlu0 %v2240
      %v2242 = vpop.xlane.xlu0 %2241
      %v2243 = vsel %vm1849, %v2188, 0.0
      %2244 = vadd.xlane.f32.xlu0 %v2243
      %v2245 = vpop.xlane.xlu0 %2244
      %v2246 = vsel %vm1849, %v2190, 0.0
      %2247 = vadd.xlane.f32.xlu0 %v2246
      %v2248 = vpop.xlane.xlu0 %2247
      %v2249 = vsel %vm1849, %v2192, 0.0
      %2250 = vadd.xlane.f32.xlu0 %v2249
      %v2251 = vpop.xlane.xlu0 %2250
      %v2252 = vsel %vm1849, %v2194, 0.0
      %2253 = vadd.xlane.f32.xlu0 %v2252
      %v2254 = vpop.xlane.xlu0 %2253
      %v2255 = vsel %vm1849, %v2196, 0.0
      %2256 = vadd.xlane.f32.xlu0 %v2255
      %v2257 = vpop.xlane.xlu0 %2256
      %v2258 = vsel %vm1849, %v2198, 0.0
      %2259 = vadd.xlane.f32.xlu0 %v2258
      %v2260 = vpop.xlane.xlu0 %2259
      %v2261 = vsel %vm1849, %v2200, 0.0
      %2262 = vadd.xlane.f32.xlu0 %v2261
      %v2263 = vpop.xlane.xlu0 %2262
      %v2264 = vsel %vm1849, %v2202, 0.0
      %2265 = vadd.xlane.f32.xlu0 %v2264
      %v2266 = vpop.xlane.xlu0 %2265
      %v2267 = vlog2.pop %v2221
      %v2268 = vmul.f32 %v2267, 0.6931472
      %v2269 = vlog2.pop %v2224
      %v2270 = vmul.f32 %v2269, 0.6931472
      %v2271 = vlog2.pop %v2227
      %v2272 = vmul.f32 %v2271, 0.6931472
      %v2273 = vlog2.pop %v2230
      %v2274 = vmul.f32 %v2273, 0.6931472
      %v2275 = vlog2.pop %v2233
      %v2276 = vmul.f32 %v2275, 0.6931472
      %v2277 = vlog2.pop %v2236
      %v2278 = vmul.f32 %v2277, 0.6931472
      %v2279 = vlog2.pop %v2239
      %v2280 = vmul.f32 %v2279, 0.6931472
      %v2281 = vlog2.pop %v2242
      %v2282 = vmul.f32 %v2281, 0.6931472
      %v2283 = vlog2.pop %v2245
      %v2284 = vmul.f32 %v2283, 0.6931472
      %v2285 = vlog2.pop %v2248
      %v2286 = vmul.f32 %v2285, 0.6931472
      %v2287 = vlog2.pop %v2251
      %v2288 = vmul.f32 %v2287, 0.6931472
      %v2289 = vlog2.pop %v2254
      %v2290 = vmul.f32 %v2289, 0.6931472
      %v2291 = vlog2.pop %v2257
      %v2292 = vmul.f32 %v2291, 0.6931472
      %v2293 = vlog2.pop %v2260
      %v2294 = vmul.f32 %v2293, 0.6931472
      %v2295 = vlog2.pop %v2263
      %v2296 = vmul.f32 %v2295, 0.6931472
      %v2297 = vlog2.pop %v2266
      %v2298 = vmul.f32 %v2297, 0.6931472
      %v2299 = vadd.f32 %v2061, %v2268
      %v2300 = vadd.f32 %v2064, %v2270
      %v2301 = vadd.f32 %v2067, %v2272
      %v2302 = vadd.f32 %v2070, %v2274
      %v2303 = vadd.f32 %v2073, %v2276
      %v2304 = vadd.f32 %v2076, %v2278
      %v2305 = vadd.f32 %v2079, %v2280
      %v2306 = vadd.f32 %v2082, %v2282
      %v2307 = vadd.f32 %v2085, %v2284
      %v2308 = vadd.f32 %v2088, %v2286
      %v2309 = vadd.f32 %v2091, %v2288
      %v2310 = vadd.f32 %v2094, %v2290
      %v2311 = vadd.f32 %v2097, %v2292
      %v2312 = vadd.f32 %v2100, %v2294
      %v2313 = vadd.f32 %v2103, %v2296
      %v2314 = vadd.f32 %v2106, %v2298
      %v2315 = vsub.f32 %v1771, %v2299
      %v2316 = vsub.f32 %v1776, %v2300
      %v2317 = vsub.f32 %v1781, %v2301
      %v2318 = vsub.f32 %v1786, %v2302
      %v2319 = vsub.f32 %v1791, %v2303
      %v2320 = vsub.f32 %v1796, %v2304
      %v2321 = vsub.f32 %v1801, %v2305
      %v2322 = vsub.f32 %v1806, %v2306
      %v2323 = vsub.f32 %v1811, %v2307
      %v2324 = vsub.f32 %v1816, %v2308
      %v2325 = vsub.f32 %v1821, %v2309
      %v2326 = vsub.f32 %v1826, %v2310
      %v2327 = vsub.f32 %v1831, %v2311
      %v2328 = vsub.f32 %v1836, %v2312
      %v2329 = vsub.f32 %v1841, %v2313
      %v2330 = vsub.f32 %v1846, %v2314
      %2347 = vrot.lane.b32.xlu0 %v2042, 80
      %v2348 = vpop.permute.xlu0 %2347
      %2349 = vrot.lane.b32.xlu0 %v2043, 80
      %v2350 = vpop.permute.xlu0 %2349
      %2351 = vrot.lane.b32.xlu0 %v2044, 80
      %v2352 = vpop.permute.xlu0 %2351
      %2353 = vrot.lane.b32.xlu0 %v2045, 80
      %v2354 = vpop.permute.xlu0 %2353
      %2355 = vrot.lane.b32.xlu0 %v2046, 80
      %v2356 = vpop.permute.xlu0 %2355
      %2357 = vrot.lane.b32.xlu0 %v2047, 80
      %v2358 = vpop.permute.xlu0 %2357
      %2359 = vrot.lane.b32.xlu0 %v2048, 80
      %v2360 = vpop.permute.xlu0 %2359
      %2361 = vrot.lane.b32.xlu0 %v2049, 80
      %v2362 = vpop.permute.xlu0 %2361
      %2363 = vrot.lane.b32.xlu0 %v2050, 80
      %v2364 = vpop.permute.xlu0 %2363
      %2365 = vrot.lane.b32.xlu0 %v2051, 80
      %v2366 = vpop.permute.xlu0 %2365
      %2367 = vrot.lane.b32.xlu0 %v2052, 80
      %v2368 = vpop.permute.xlu0 %2367
      %2369 = vrot.lane.b32.xlu0 %v2053, 80
      %v2370 = vpop.permute.xlu0 %2369
      %2371 = vrot.lane.b32.xlu0 %v2054, 80
      %v2372 = vpop.permute.xlu0 %2371
      %2373 = vrot.lane.b32.xlu0 %v2055, 80
      %v2374 = vpop.permute.xlu0 %2373
      %2375 = vrot.lane.b32.xlu0 %v2056, 80
      %v2376 = vpop.permute.xlu0 %2375
      %2377 = vrot.lane.b32.xlu0 %v2057, 80
      %v2378 = vpop.permute.xlu0 %2377
      %2411 = vrot.lane.b32.xlu0 %v2315, 80
      %v2412 = vpop.permute.xlu0 %2411
      %2413 = vrot.lane.b32.xlu0 %v2316, 80
      %v2414 = vpop.permute.xlu0 %2413
      %2415 = vrot.lane.b32.xlu0 %v2317, 80
      %v2416 = vpop.permute.xlu0 %2415
      %2417 = vrot.lane.b32.xlu0 %v2318, 80
      %v2418 = vpop.permute.xlu0 %2417
      %2419 = vrot.lane.b32.xlu0 %v2319, 80
      %v2420 = vpop.permute.xlu0 %2419
      %2421 = vrot.lane.b32.xlu0 %v2320, 80
      %v2422 = vpop.permute.xlu0 %2421
      %2423 = vrot.lane.b32.xlu0 %v2321, 80
      %v2424 = vpop.permute.xlu0 %2423
      %2425 = vrot.lane.b32.xlu0 %v2322, 80
      %v2426 = vpop.permute.xlu0 %2425
      %2427 = vrot.lane.b32.xlu0 %v2323, 80
      %v2428 = vpop.permute.xlu0 %2427
      %2429 = vrot.lane.b32.xlu0 %v2324, 80
      %v2430 = vpop.permute.xlu0 %2429
      %2431 = vrot.lane.b32.xlu0 %v2325, 80
      %v2432 = vpop.permute.xlu0 %2431
      %2433 = vrot.lane.b32.xlu0 %v2326, 80
      %v2434 = vpop.permute.xlu0 %2433
      %2435 = vrot.lane.b32.xlu0 %v2327, 80
      %v2436 = vpop.permute.xlu0 %2435
      %2437 = vrot.lane.b32.xlu0 %v2328, 80
      %v2438 = vpop.permute.xlu0 %2437
      %2439 = vrot.lane.b32.xlu0 %v2329, 80
      %v2440 = vpop.permute.xlu0 %2439
      %2441 = vrot.lane.b32.xlu0 %v2330, 80
      %v2442 = vpop.permute.xlu0 %2441
      %2475 = vrot.lane.b32.xlu0 %v1771, 80
      %v2476 = vpop.permute.xlu0 %2475
      %2477 = vrot.lane.b32.xlu0 %v1776, 80
      %v2478 = vpop.permute.xlu0 %2477
      %2479 = vrot.lane.b32.xlu0 %v1781, 80
      %v2480 = vpop.permute.xlu0 %2479
      %2481 = vrot.lane.b32.xlu0 %v1786, 80
      %v2482 = vpop.permute.xlu0 %2481
      %2483 = vrot.lane.b32.xlu0 %v1791, 80
      %v2484 = vpop.permute.xlu0 %2483
      %2485 = vrot.lane.b32.xlu0 %v1796, 80
      %v2486 = vpop.permute.xlu0 %2485
      %2487 = vrot.lane.b32.xlu0 %v1801, 80
      %v2488 = vpop.permute.xlu0 %2487
      %2489 = vrot.lane.b32.xlu0 %v1806, 80
      %v2490 = vpop.permute.xlu0 %2489
      %2491 = vrot.lane.b32.xlu0 %v1811, 80
      %v2492 = vpop.permute.xlu0 %2491
      %2493 = vrot.lane.b32.xlu0 %v1816, 80
      %v2494 = vpop.permute.xlu0 %2493
      %2495 = vrot.lane.b32.xlu0 %v1821, 80
      %v2496 = vpop.permute.xlu0 %2495
      %2497 = vrot.lane.b32.xlu0 %v1826, 80
      %v2498 = vpop.permute.xlu0 %2497
      %2499 = vrot.lane.b32.xlu0 %v1831, 80
      %v2500 = vpop.permute.xlu0 %2499
      %2501 = vrot.lane.b32.xlu0 %v1836, 80
      %v2502 = vpop.permute.xlu0 %2501
      %2503 = vrot.lane.b32.xlu0 %v1841, 80
      %v2504 = vpop.permute.xlu0 %2503
      %2505 = vrot.lane.b32.xlu0 %v1846, 80
      %v2506 = vpop.permute.xlu0 %2505
      %2539 = vrot.lane.b32.xlu0 %v1092, 80
      %v2540 = vpop.permute.xlu0 %2539
      %2541 = vrot.lane.b32.xlu0 %v1093, 80
      %v2542 = vpop.permute.xlu0 %2541
      %2543 = vrot.lane.b32.xlu0 %v1094, 80
      %v2544 = vpop.permute.xlu0 %2543
      %2545 = vrot.lane.b32.xlu0 %v1095, 80
      %v2546 = vpop.permute.xlu0 %2545
      %2547 = vrot.lane.b32.xlu0 %v1096, 80
      %v2548 = vpop.permute.xlu0 %2547
      %2549 = vrot.lane.b32.xlu0 %v1097, 80
      %v2550 = vpop.permute.xlu0 %2549
      %2551 = vrot.lane.b32.xlu0 %v1098, 80
      %v2552 = vpop.permute.xlu0 %2551
      %2553 = vrot.lane.b32.xlu0 %v1099, 80
      %v2554 = vpop.permute.xlu0 %2553
      %2555 = vrot.lane.b32.xlu0 %v1100, 80
      %v2556 = vpop.permute.xlu0 %2555
      %2557 = vrot.lane.b32.xlu0 %v1101, 80
      %v2558 = vpop.permute.xlu0 %2557
      %2559 = vrot.lane.b32.xlu0 %v1102, 80
      %v2560 = vpop.permute.xlu0 %2559
      %2561 = vrot.lane.b32.xlu0 %v1103, 80
      %v2562 = vpop.permute.xlu0 %2561
      %2563 = vrot.lane.b32.xlu0 %v1104, 80
      %v2564 = vpop.permute.xlu0 %2563
      %2565 = vrot.lane.b32.xlu0 %v1105, 80
      %v2566 = vpop.permute.xlu0 %2565
      %2567 = vrot.lane.b32.xlu0 %v1106, 80
      %v2568 = vpop.permute.xlu0 %2567
      %2569 = vrot.lane.b32.xlu0 %v1107, 80
      %v2570 = vpop.permute.xlu0 %2569
      %v2587 = vsel %vm172, %v788, %v1521
      %v2588 = vsel %vm172, %v793, %v1526
      %v2589 = vsel %vm172, %v798, %v1531
      %v2590 = vsel %vm172, %v803, %v1536
      %v2591 = vsel %vm172, %v808, %v1541
      %v2592 = vsel %vm172, %v813, %v1546
      %v2593 = vsel %vm172, %v818, %v1551
      %v2594 = vsel %vm172, %v823, %v1556
      %v2595 = vsel %vm172, %v828, %v1561
      %v2596 = vsel %vm172, %v833, %v1566
      %v2597 = vsel %vm172, %v838, %v1571
      %v2598 = vsel %vm172, %v843, %v1576
      %v2599 = vsel %vm172, %v848, %v1581
      %v2600 = vsel %vm172, %v853, %v1586
      %v2601 = vsel %vm172, %v858, %v1591
      %v2602 = vsel %vm172, %v863, %v1596
      %vm2603 = vcmask 654336
      %v2604 = vsel %vm2603, %v2587, %v2348
      %v2605 = vsel %vm2603, %v2588, %v2350
      %v2606 = vsel %vm2603, %v2589, %v2352
      %v2607 = vsel %vm2603, %v2590, %v2354
      %v2608 = vsel %vm2603, %v2591, %v2356
      %v2609 = vsel %vm2603, %v2592, %v2358
      %v2610 = vsel %vm2603, %v2593, %v2360
      %v2611 = vsel %vm2603, %v2594, %v2362
      %v2612 = vsel %vm2603, %v2595, %v2364
      %v2613 = vsel %vm2603, %v2596, %v2366
      %v2614 = vsel %vm2603, %v2597, %v2368
      %v2615 = vsel %vm2603, %v2598, %v2370
      %v2616 = vsel %vm2603, %v2599, %v2372
      %v2617 = vsel %vm2603, %v2600, %v2374
      %v2618 = vsel %vm2603, %v2601, %v2376
      %v2619 = vsel %vm2603, %v2602, %v2378
      %vm2620 = vcmask 719872
      %v2621 = vsel %vm2620, %v2604, %v2412
      %v2622 = vsel %vm2620, %v2605, %v2414
      %v2623 = vsel %vm2620, %v2606, %v2416
      %v2624 = vsel %vm2620, %v2607, %v2418
      %v2625 = vsel %vm2620, %v2608, %v2420
      %v2626 = vsel %vm2620, %v2609, %v2422
      %v2627 = vsel %vm2620, %v2610, %v2424
      %v2628 = vsel %vm2620, %v2611, %v2426
      %v2629 = vsel %vm2620, %v2612, %v2428
      %v2630 = vsel %vm2620, %v2613, %v2430
      %v2631 = vsel %vm2620, %v2614, %v2432
      %v2632 = vsel %vm2620, %v2615, %v2434
      %v2633 = vsel %vm2620, %v2616, %v2436
      %v2634 = vsel %vm2620, %v2617, %v2438
      %v2635 = vsel %vm2620, %v2618, %v2440
      %v2636 = vsel %vm2620, %v2619, %v2442
      %vm2637 = vcmask 785408
      %v2638 = vsel %vm2637, %v2621, %v2476
      %v2639 = vsel %vm2637, %v2622, %v2478
      %v2640 = vsel %vm2637, %v2623, %v2480
      %v2641 = vsel %vm2637, %v2624, %v2482
      %v2642 = vsel %vm2637, %v2625, %v2484
      %v2643 = vsel %vm2637, %v2626, %v2486
      %v2644 = vsel %vm2637, %v2627, %v2488
      %v2645 = vsel %vm2637, %v2628, %v2490
      %v2646 = vsel %vm2637, %v2629, %v2492
      %v2647 = vsel %vm2637, %v2630, %v2494
      %v2648 = vsel %vm2637, %v2631, %v2496
      %v2649 = vsel %vm2637, %v2632, %v2498
      %v2650 = vsel %vm2637, %v2633, %v2500
      %v2651 = vsel %vm2637, %v2634, %v2502
      %v2652 = vsel %vm2637, %v2635, %v2504
      %v2653 = vsel %vm2637, %v2636, %v2506
      %vm2654 = vcmask 916480
      %v2655 = vsel %vm2654, %v2638, %v2540
      %v2656 = vsel %vm2654, %v2639, %v2542
      %v2657 = vsel %vm2654, %v2640, %v2544
      %v2658 = vsel %vm2654, %v2641, %v2546
      %v2659 = vsel %vm2654, %v2642, %v2548
      %v2660 = vsel %vm2654, %v2643, %v2550
      %v2661 = vsel %vm2654, %v2644, %v2552
      %v2662 = vsel %vm2654, %v2645, %v2554
      %v2663 = vsel %vm2654, %v2646, %v2556
      %v2664 = vsel %vm2654, %v2647, %v2558
      %v2665 = vsel %vm2654, %v2648, %v2560
      %v2666 = vsel %vm2654, %v2649, %v2562
      %v2667 = vsel %vm2654, %v2650, %v2564
      %v2668 = vsel %vm2654, %v2651, %v2566
      %v2669 = vsel %vm2654, %v2652, %v2568
      %v2670 = vsel %vm2654, %v2653, %v2570
      %vm2671 = vcmask 941056
      %v2672 = vsel %vm2671, %v2655, 0.0
      %v2673 = vsel %vm2671, %v2656, 0.0
      %v2674 = vsel %vm2671, %v2657, 0.0
      %v2675 = vsel %vm2671, %v2658, 0.0
      %v2676 = vsel %vm2671, %v2659, 0.0
      %v2677 = vsel %vm2671, %v2660, 0.0
      %v2678 = vsel %vm2671, %v2661, 0.0
      %v2679 = vsel %vm2671, %v2662, 0.0
      %v2680 = vsel %vm2671, %v2663, 0.0
      %v2681 = vsel %vm2671, %v2664, 0.0
      %v2682 = vsel %vm2671, %v2665, 0.0
      %v2683 = vsel %vm2671, %v2666, 0.0
      %v2684 = vsel %vm2671, %v2667, 0.0
      %v2685 = vsel %vm2671, %v2668, 0.0
      %v2686 = vsel %vm2671, %v2669, 0.0
      %v2687 = vsel %vm2671, %v2670, 0.0
      %2688 = vst [vmem:[%s145] sm:$0xff] %v2672
      %2689 = vst [vmem:[%s145 + $0x8] sm:$0xff] %v2673
      %2690 = vst [vmem:[%s145 + $0x10] sm:$0xff] %v2674
      %2691 = vst [vmem:[%s145 + $0x18] sm:$0xff] %v2675
      %2692 = vst [vmem:[%s145 + $0x20] sm:$0xff] %v2676
      %2693 = vst [vmem:[%s145 + $0x28] sm:$0xff] %v2677
      %2694 = vst [vmem:[%s145 + $0x30] sm:$0xff] %v2678
      %2695 = vst [vmem:[%s145 + $0x38] sm:$0xff] %v2679
      %2696 = vst [vmem:[%s145 + $0x40] sm:$0xff] %v2680
      %2697 = vst [vmem:[%s145 + $0x48] sm:$0xff] %v2681
      %2698 = vst [vmem:[%s145 + $0x50] sm:$0xff] %v2682
      %2699 = vst [vmem:[%s145 + $0x58] sm:$0xff] %v2683
      %2700 = vst [vmem:[%s145 + $0x60] sm:$0xff] %v2684
      %2701 = vst [vmem:[%s145 + $0x68] sm:$0xff] %v2685
      %2702 = vst [vmem:[%s145 + $0x70] sm:$0xff] %v2686
      %2703 = vst [vmem:[%s145 + $0x78] sm:$0xff] %v2687
      %s2704 = smul.u32 16, %s13
      %p2705 = scmp.lt.s32.totalorder %s2704, 31
      %s2706 = scalar_select %p2705, %s2704, 31
      %s2707 = smul.addr %s2706, 8
      %s2708 = scalar_lea.vmem %s2, %s2707
      // Predicated region
      $region29: #{gmvae_forward.1} parent=27 // pred_check
        %p2709 = pneg %p78
      $region30: #{gmvae_forward.1} parent=27 // pred_check_branch
        %2711 = sbr.rel (%p2709) target = $region32
      $region31: #{gmvae_forward.1} parent=27 // pred_region
        %s2712 = smul.u32 16, %s13
      $region32: #{gmvae_forward.1} parent=27 // pred_fallthru
        _
    $region28: #{gmvae_forward.1} parent=5 // pred_fallthru
      _
    %p2713 = scmp.le.s32.totalorder 2, %s8
    // Predicated region
    $region33: #{gmvae_forward.1} parent=5 // pred_check
      %p2714 = pneg %p2713
    $region34: #{gmvae_forward.1} parent=5 // pred_check_branch
      %2716 = sbr.rel (%p2714) target = $region36
    $region35: #{gmvae_forward.1} parent=5 // pred_region
      %s2717 = ssub.s32 %s8, 2
      // Predicated region
      $region37: #{gmvae_forward.1} parent=35 // pred_check
        %p2718 = pneg %p84
      $region38: #{gmvae_forward.1} parent=35 // pred_check_branch
        %2720 = sbr.rel (%p2718) target = $region40
      $region39: #{gmvae_forward.1} parent=35 // pred_region
        %s2721 = smul.u32 16, %s14
        %p2722 = scmp.lt.s32.totalorder %s2721, 31
        %s2723 = scalar_select %p2722, %s2721, 31
        %s2724 = smul.addr %s2723, 8
        %s2725 = scalar_lea.vmem %s2, %s2724
      $region40: #{gmvae_forward.1} parent=35 // pred_fallthru
        _
    $region36: #{gmvae_forward.1} parent=5 // pred_fallthru
      _
  $region6: #{gmvae_forward.1} parent=0 // loop_footer
    %s12 = sadd.s32 1, %s8
  $region7: #{gmvae_forward.1} parent=0 // loop_footer_branch
    %7 = sbr.rel target = $region3
  $region8: #{gmvae_forward.1} parent=0 // loop_exit
    _

</llo_original>
